<compile_context>
chip_gen: v5e
topology: v5e:2x2
jax: 0.10.0
libtpu: 0.0.40
codegen_flags: <defaults>
</compile_context>

<pallas_src>
import math
import functools

import jax
import jax.numpy as jnp
from jax.experimental import pallas as pl
from jax.experimental.pallas import tpu as pltpu

LN_EPS = 1e-5  # GPT2 layer_norm_epsilon default


# ----------------------------- in-kernel helpers -----------------------------

def _layernorm(x, g, b):
    mu = jnp.mean(x, axis=-1, keepdims=True)
    xc = x - mu
    var = jnp.mean(xc * xc, axis=-1, keepdims=True)
    return xc * jax.lax.rsqrt(var + LN_EPS) * g + b


def _gelu_new(x):
    # GPT2 "gelu_new" (tanh approximation)
    c = math.sqrt(2.0 / math.pi)
    return 0.5 * x * (1.0 + jnp.tanh(c * (x + 0.044715 * x * x * x)))


# ------------------------------- fused kernel --------------------------------

def fused_transformer_kernel(
    n_layer, n_head,
    # inputs
    zs_ref, w_in_ref, b_in_ref, wpe_ref,
    ln1g_ref, ln1b_ref, wqkv_ref, bqkv_ref, watp_ref, batp_ref,
    ln2g_ref, ln2b_ref, wfc_ref, bfc_ref, wpr_ref, bpr_ref,
    lnfg_ref, lnfb_ref, wout_ref, bout_ref,
    # output
    o_ref,
    # scratch
    hbuf_ref,
):
    S = zs_ref.shape[0]
    E = w_in_ref.shape[1]
    hd = E // n_head
    scale = 1.0 / math.sqrt(hd)

    # ---- read_in + position embedding ----
    h = (jnp.dot(zs_ref[...], w_in_ref[...], preferred_element_type=jnp.float32)
         + b_in_ref[...] + wpe_ref[...])                       # (S, E)

    # causal additive mask, built once and reused by every layer/head
    row = jax.lax.broadcasted_iota(jnp.int32, (S, S), 0)
    col = jax.lax.broadcasted_iota(jnp.int32, (S, S), 1)
    neg_bias = jnp.where(col <= row, 0.0, -1e30).astype(jnp.float32)

    # ---- GPT2 blocks (static layer loop; weights stay in VMEM) ----
    for l in range(n_layer):
        ln1g, ln1b = ln1g_ref[l], ln1b_ref[l]
        wqkv, bqkv = wqkv_ref[l], bqkv_ref[l]
        watp, batp = watp_ref[l], batp_ref[l]
        ln2g, ln2b = ln2g_ref[l], ln2b_ref[l]
        wfc, bfc = wfc_ref[l], bfc_ref[l]
        wpr, bpr = wpr_ref[l], bpr_ref[l]

        # -- causal multi-head self-attention --
        x = _layernorm(h, ln1g, ln1b)
        qkv = jnp.dot(x, wqkv, preferred_element_type=jnp.float32) + bqkv  # (S,3E)
        q_all = qkv[:, :E] * scale              # fold 1/sqrt(hd) into q once
        k_all = qkv[:, E:2 * E]
        v_all = qkv[:, 2 * E:]

        attn = batp                              # (1,E), broadcasts on first add
        for hix in range(n_head):                # small static head loop
            lo = hix * hd
            hi = lo + hd
            q = q_all[:, lo:hi]
            k = k_all[:, lo:hi]
            v = v_all[:, lo:hi]
            # scores without materializing k.T (contract q dim1 with k dim1)
            s = jax.lax.dot_general(q, k, (((1,), (1,)), ((), ())),
                                    preferred_element_type=jnp.float32)
            s = s + neg_bias
            m = jnp.max(s, axis=-1, keepdims=True)
            p = jnp.exp(s - m)
            denom = jnp.sum(p, axis=-1, keepdims=True)
            p = p * pl.reciprocal(denom, approx=True)          # EUP, not VPU divide
            ctx = jnp.dot(p, v, preferred_element_type=jnp.float32)   # (S, hd)
            # project this head through its row-slice of W_proj (no concat)
            attn = attn + jnp.dot(ctx, watp[lo:hi, :],
                                  preferred_element_type=jnp.float32)
        h = h + attn

        # -- MLP --
        x = _layernorm(h, ln2g, ln2b)
        ff = jnp.dot(x, wfc, preferred_element_type=jnp.float32) + bfc
        ff = _gelu_new(ff)
        ff = jnp.dot(ff, wpr, preferred_element_type=jnp.float32) + bpr
        h = h + ff

    # ---- read-out only on the rows that survive prediction[:, ::2, :] ----
    points = S // 2
    hbuf_ref[...] = h
    h_even = hbuf_ref[pl.ds(0, points, stride=2), :]           # rows 0,2,4,...
    x = _layernorm(h_even, lnfg_ref[...], lnfb_ref[...])
    p = jnp.dot(x, wout_ref[...], preferred_element_type=jnp.float32) + bout_ref[...]
    sig = 1.0 / (1.0 + jnp.exp(-p))
    o_ref[...] = (sig - 0.5) * math.sqrt(2.0)


# ------------------------------ pallas wrapper --------------------------------

def _full_spec(arr):
    # Full-array spec: constant block index so Pallas keeps it VMEM-resident
    # across grid steps instead of re-DMAing.
    nd = arr.ndim
    return pl.BlockSpec(tuple(arr.shape), lambda b: (0,) * nd)


def transformer_forward(ys_batch, xs_batch, params, n_head):
    """Equivalent of TransformerModel.forward(ys_batch, xs_batch)."""
    B, points, D = ys_batch.shape
    # _combine(ys_batch, xs_batch): interleave y0, x0, y1, x1, ...  (JAX glue)
    zs = jnp.stack((ys_batch, xs_batch), axis=2).reshape(B, 2 * points, D)
    zs = zs.astype(jnp.float32)
    S = 2 * points
    E = params["w_in"].shape[1]
    n_layer = params["ln1_g"].shape[0]

    wpe_s = params["wpe"][:S]

    inputs = [
        zs, params["w_in"], params["b_in"], wpe_s,
        params["ln1_g"], params["ln1_b"], params["w_qkv"], params["b_qkv"],
        params["w_atp"], params["b_atp"], params["ln2_g"], params["ln2_b"],
        params["w_fc"], params["b_fc"], params["w_pr"], params["b_pr"],
        params["lnf_g"], params["lnf_b"], params["w_out"], params["b_out"],
    ]

    in_specs = ([pl.BlockSpec((None, S, D), lambda b: (b, 0, 0))]
                + [_full_spec(a) for a in inputs[1:]])

    kernel = functools.partial(fused_transformer_kernel, n_layer, n_head)
    out = pl.pallas_call(
        kernel,
        grid=(B,),
        in_specs=in_specs,
        out_specs=pl.BlockSpec((None, points, D), lambda b: (b, 0, 0)),
        out_shape=jax.ShapeDtypeStruct((B, points, D), jnp.float32),
        scratch_shapes=[pltpu.VMEM((S, E), jnp.float32)],
        compiler_params=pltpu.CompilerParams(dimension_semantics=("parallel",)),
    )(*inputs)
    # prediction[:, ::2, :] is produced directly by the kernel (even rows only).
    return out


# ------------------------------ parameter init --------------------------------

def init_params(key, n_dims, n_positions, n_embd, n_layer):
    ks = jax.random.split(key, 8)

    def nrm(k, shape):
        return (0.02 * jax.random.normal(k, shape)).astype(jnp.float32)

    E, L = n_embd, n_layer
    return {
        "w_in": nrm(ks[0], (n_dims, E)),
        "b_in": jnp.zeros((1, E), jnp.float32),
        "wpe": nrm(ks[1], (2 * n_positions, E)),
        "lnf_g": jnp.ones((1, E), jnp.float32),
        "lnf_b": jnp.zeros((1, E), jnp.float32),
        "w_out": nrm(ks[2], (E, n_dims)),
        "b_out": jnp.zeros((1, n_dims), jnp.float32),
        # per-layer params stacked along a leading layer axis
        "ln1_g": jnp.ones((L, 1, E), jnp.float32),
        "ln1_b": jnp.zeros((L, 1, E), jnp.float32),
        "w_qkv": nrm(ks[3], (L, E, 3 * E)),          # c_attn (Conv1D: in x out)
        "b_qkv": jnp.zeros((L, 1, 3 * E), jnp.float32),
        "w_atp": nrm(ks[4], (L, E, E)),              # attn c_proj
        "b_atp": jnp.zeros((L, 1, E), jnp.float32),
        "ln2_g": jnp.ones((L, 1, E), jnp.float32),
        "ln2_b": jnp.zeros((L, 1, E), jnp.float32),
        "w_fc": nrm(ks[5], (L, E, 4 * E)),           # mlp c_fc
        "b_fc": jnp.zeros((L, 1, 4 * E), jnp.float32),
        "w_pr": nrm(ks[6], (L, 4 * E, E)),           # mlp c_proj
        "b_pr": jnp.zeros((L, 1, E), jnp.float32),
    }


# ----------------------------------- main --------------------------------------

if __name__ == "__main__":
    n_dims, n_positions, n_embd, n_layer, n_head = 8, 8, 32, 2, 2
    B, points = 2, 8  # seq len = 2 * points = 16 <= 2 * n_positions

    key = jax.random.PRNGKey(0)
    k_params, k_x, k_y = jax.random.split(key, 3)
    params = init_params(k_params, n_dims, n_positions, n_embd, n_layer)

    xs_batch = jax.random.normal(k_x, (B, points, n_dims), jnp.float32)
    ys_batch = jax.random.normal(k_y, (B, points, n_dims), jnp.float32)

    out = transformer_forward(ys_batch, xs_batch, params, n_head)
    out = jax.block_until_ready(out)
    assert out.shape == (B, points, n_dims), out.shape
    assert bool(jnp.all(jnp.isfinite(out))), "non-finite output"
    print("KERNEL_OK")
</pallas_src>

<mosaic_0001>
module attributes {stable_mosaic.version = 11 : i64} {
  func.func @fused_transformer_kernel(%arg0: i32, %arg1: memref<1x16x8xf32, #tpu.memory_space<vmem>>, %arg2: memref<8x32xf32, #tpu.memory_space<vmem>>, %arg3: memref<1x32xf32, #tpu.memory_space<vmem>>, %arg4: memref<16x32xf32, #tpu.memory_space<vmem>>, %arg5: memref<2x1x32xf32, #tpu.memory_space<vmem>>, %arg6: memref<2x1x32xf32, #tpu.memory_space<vmem>>, %arg7: memref<2x32x96xf32, #tpu.memory_space<vmem>>, %arg8: memref<2x1x96xf32, #tpu.memory_space<vmem>>, %arg9: memref<2x32x32xf32, #tpu.memory_space<vmem>>, %arg10: memref<2x1x32xf32, #tpu.memory_space<vmem>>, %arg11: memref<2x1x32xf32, #tpu.memory_space<vmem>>, %arg12: memref<2x1x32xf32, #tpu.memory_space<vmem>>, %arg13: memref<2x32x128xf32, #tpu.memory_space<vmem>>, %arg14: memref<2x1x128xf32, #tpu.memory_space<vmem>>, %arg15: memref<2x128x32xf32, #tpu.memory_space<vmem>>, %arg16: memref<2x1x32xf32, #tpu.memory_space<vmem>>, %arg17: memref<1x32xf32, #tpu.memory_space<vmem>>, %arg18: memref<1x32xf32, #tpu.memory_space<vmem>>, %arg19: memref<32x8xf32, #tpu.memory_space<vmem>>, %arg20: memref<1x8xf32, #tpu.memory_space<vmem>>, %arg21: memref<1x8x8xf32, #tpu.memory_space<vmem>>, %arg22: memref<16x32xf32, #tpu.memory_space<vmem>>) attributes {dimension_semantics = [#tpu.dimension_semantics<parallel>], iteration_bounds = array<i64: 2>, scalar_prefetch = 0 : i64, scratch_operands = 1 : i64, tpu.core_type = #tpu.core_type<tc>, window_params = [{transform_indices = @transform_0, window_bounds = array<i64: 1, 16, 8>}, {pipeline_mode = #tpu.pipeline_mode<synchronous>, transform_indices = @transform_1, window_bounds = array<i64: 8, 32>}, {pipeline_mode = #tpu.pipeline_mode<synchronous>, transform_indices = @transform_2, window_bounds = array<i64: 1, 32>}, {pipeline_mode = #tpu.pipeline_mode<synchronous>, transform_indices = @transform_3, window_bounds = array<i64: 16, 32>}, {pipeline_mode = #tpu.pipeline_mode<synchronous>, transform_indices = @transform_4, window_bounds = array<i64: 2, 1, 32>}, {pipeline_mode = #tpu.pipeline_mode<synchronous>, transform_indices = @transform_5, window_bounds = array<i64: 2, 1, 32>}, {pipeline_mode = #tpu.pipeline_mode<synchronous>, transform_indices = @transform_6, window_bounds = array<i64: 2, 32, 96>}, {pipeline_mode = #tpu.pipeline_mode<synchronous>, transform_indices = @transform_7, window_bounds = array<i64: 2, 1, 96>}, {pipeline_mode = #tpu.pipeline_mode<synchronous>, transform_indices = @transform_8, window_bounds = array<i64: 2, 32, 32>}, {pipeline_mode = #tpu.pipeline_mode<synchronous>, transform_indices = @transform_9, window_bounds = array<i64: 2, 1, 32>}, {pipeline_mode = #tpu.pipeline_mode<synchronous>, transform_indices = @transform_10, window_bounds = array<i64: 2, 1, 32>}, {pipeline_mode = #tpu.pipeline_mode<synchronous>, transform_indices = @transform_11, window_bounds = array<i64: 2, 1, 32>}, {pipeline_mode = #tpu.pipeline_mode<synchronous>, transform_indices = @transform_12, window_bounds = array<i64: 2, 32, 128>}, {pipeline_mode = #tpu.pipeline_mode<synchronous>, transform_indices = @transform_13, window_bounds = array<i64: 2, 1, 128>}, {pipeline_mode = #tpu.pipeline_mode<synchronous>, transform_indices = @transform_14, window_bounds = array<i64: 2, 128, 32>}, {pipeline_mode = #tpu.pipeline_mode<synchronous>, transform_indices = @transform_15, window_bounds = array<i64: 2, 1, 32>}, {pipeline_mode = #tpu.pipeline_mode<synchronous>, transform_indices = @transform_16, window_bounds = array<i64: 1, 32>}, {pipeline_mode = #tpu.pipeline_mode<synchronous>, transform_indices = @transform_17, window_bounds = array<i64: 1, 32>}, {pipeline_mode = #tpu.pipeline_mode<synchronous>, transform_indices = @transform_18, window_bounds = array<i64: 32, 8>}, {pipeline_mode = #tpu.pipeline_mode<synchronous>, transform_indices = @transform_19, window_bounds = array<i64: 1, 8>}, {transform_indices = @transform_20, window_bounds = array<i64: 1, 8, 8>}]} {
    %c0 = arith.constant 0 : index
    %c0_0 = arith.constant 0 : index
    %c0_1 = arith.constant 0 : index
    %0 = vector.load %arg1[%c0, %c0_0, %c0_1] : memref<1x16x8xf32, #tpu.memory_space<vmem>>, vector<1x16x8xf32>
    %1 = vector.shape_cast %0 : vector<1x16x8xf32> to vector<16x8xf32>
    %c0_2 = arith.constant 0 : index
    %c0_3 = arith.constant 0 : index
    %2 = vector.load %arg2[%c0_2, %c0_3] : memref<8x32xf32, #tpu.memory_space<vmem>>, vector<8x32xf32>
    %cst = arith.constant dense<0.000000e+00> : vector<16x32xf32>
    %3 = tpu.matmul %1, %2, %cst {dimension_numbers = #tpu.dot_dimension_numbers<[1], [0], [0], [1], [0, 0, 1, 1], [], []>} : vector<16x8xf32>, vector<8x32xf32>, vector<16x32xf32> -> vector<16x32xf32>
    %c0_4 = arith.constant 0 : index
    %c0_5 = arith.constant 0 : index
    %4 = vector.load %arg3[%c0_4, %c0_5] : memref<1x32xf32, #tpu.memory_space<vmem>>, vector<1x32xf32>
    %5 = vector.broadcast %4 : vector<1x32xf32> to vector<16x32xf32>
    %6 = arith.addf %3, %5 : vector<16x32xf32>
    %c0_6 = arith.constant 0 : index
    %c0_7 = arith.constant 0 : index
    %7 = vector.load %arg4[%c0_6, %c0_7] : memref<16x32xf32, #tpu.memory_space<vmem>>, vector<16x32xf32>
    %8 = arith.addf %6, %7 : vector<16x32xf32>
    %9 = tpu.iota {dimensions = array<i32: 0>} : vector<16x16xi32>
    %10 = tpu.iota {dimensions = array<i32: 1>} : vector<16x16xi32>
    %11 = arith.cmpi sle, %10, %9 : vector<16x16xi32>
    %cst_8 = arith.constant 0.000000e+00 : f32
    %cst_9 = arith.constant -1.000000e+30 : f32
    %12 = vector.broadcast %cst_8 : f32 to vector<16x16xf32>
    %13 = vector.broadcast %cst_9 : f32 to vector<16x16xf32>
    %14 = arith.select %11, %12, %13 : vector<16x16xi1>, vector<16x16xf32>
    %c0_10 = arith.constant 0 : index
    %c0_11 = arith.constant 0 : index
    %c0_12 = arith.constant 0 : index
    %15 = vector.load %arg5[%c0_10, %c0_11, %c0_12] : memref<2x1x32xf32, #tpu.memory_space<vmem>>, vector<1x1x32xf32>
    %16 = vector.shape_cast %15 : vector<1x1x32xf32> to vector<1x32xf32>
    %c0_13 = arith.constant 0 : index
    %c0_14 = arith.constant 0 : index
    %c0_15 = arith.constant 0 : index
    %17 = vector.load %arg6[%c0_13, %c0_14, %c0_15] : memref<2x1x32xf32, #tpu.memory_space<vmem>>, vector<1x1x32xf32>
    %18 = vector.shape_cast %17 : vector<1x1x32xf32> to vector<1x32xf32>
    %c0_16 = arith.constant 0 : index
    %c0_17 = arith.constant 0 : index
    %c0_18 = arith.constant 0 : index
    %19 = vector.load %arg7[%c0_16, %c0_17, %c0_18] : memref<2x32x96xf32, #tpu.memory_space<vmem>>, vector<1x32x96xf32>
    %20 = vector.shape_cast %19 : vector<1x32x96xf32> to vector<32x96xf32>
    %c0_19 = arith.constant 0 : index
    %c0_20 = arith.constant 0 : index
    %c0_21 = arith.constant 0 : index
    %21 = vector.load %arg8[%c0_19, %c0_20, %c0_21] : memref<2x1x96xf32, #tpu.memory_space<vmem>>, vector<1x1x96xf32>
    %22 = vector.shape_cast %21 : vector<1x1x96xf32> to vector<1x96xf32>
    %c0_22 = arith.constant 0 : index
    %c0_23 = arith.constant 0 : index
    %c0_24 = arith.constant 0 : index
    %23 = vector.load %arg9[%c0_22, %c0_23, %c0_24] : memref<2x32x32xf32, #tpu.memory_space<vmem>>, vector<1x32x32xf32>
    %24 = vector.shape_cast %23 : vector<1x32x32xf32> to vector<32x32xf32>
    %c0_25 = arith.constant 0 : index
    %c0_26 = arith.constant 0 : index
    %c0_27 = arith.constant 0 : index
    %25 = vector.load %arg10[%c0_25, %c0_26, %c0_27] : memref<2x1x32xf32, #tpu.memory_space<vmem>>, vector<1x1x32xf32>
    %26 = vector.shape_cast %25 : vector<1x1x32xf32> to vector<1x32xf32>
    %c0_28 = arith.constant 0 : index
    %c0_29 = arith.constant 0 : index
    %c0_30 = arith.constant 0 : index
    %27 = vector.load %arg11[%c0_28, %c0_29, %c0_30] : memref<2x1x32xf32, #tpu.memory_space<vmem>>, vector<1x1x32xf32>
    %28 = vector.shape_cast %27 : vector<1x1x32xf32> to vector<1x32xf32>
    %c0_31 = arith.constant 0 : index
    %c0_32 = arith.constant 0 : index
    %c0_33 = arith.constant 0 : index
    %29 = vector.load %arg12[%c0_31, %c0_32, %c0_33] : memref<2x1x32xf32, #tpu.memory_space<vmem>>, vector<1x1x32xf32>
    %30 = vector.shape_cast %29 : vector<1x1x32xf32> to vector<1x32xf32>
    %c0_34 = arith.constant 0 : index
    %c0_35 = arith.constant 0 : index
    %c0_36 = arith.constant 0 : index
    %31 = vector.load %arg13[%c0_34, %c0_35, %c0_36] : memref<2x32x128xf32, #tpu.memory_space<vmem>>, vector<1x32x128xf32>
    %32 = vector.shape_cast %31 : vector<1x32x128xf32> to vector<32x128xf32>
    %c0_37 = arith.constant 0 : index
    %c0_38 = arith.constant 0 : index
    %c0_39 = arith.constant 0 : index
    %33 = vector.load %arg14[%c0_37, %c0_38, %c0_39] : memref<2x1x128xf32, #tpu.memory_space<vmem>>, vector<1x1x128xf32>
    %34 = vector.shape_cast %33 : vector<1x1x128xf32> to vector<1x128xf32>
    %c0_40 = arith.constant 0 : index
    %c0_41 = arith.constant 0 : index
    %c0_42 = arith.constant 0 : index
    %35 = vector.load %arg15[%c0_40, %c0_41, %c0_42] : memref<2x128x32xf32, #tpu.memory_space<vmem>>, vector<1x128x32xf32>
    %36 = vector.shape_cast %35 : vector<1x128x32xf32> to vector<128x32xf32>
    %c0_43 = arith.constant 0 : index
    %c0_44 = arith.constant 0 : index
    %c0_45 = arith.constant 0 : index
    %37 = vector.load %arg16[%c0_43, %c0_44, %c0_45] : memref<2x1x32xf32, #tpu.memory_space<vmem>>, vector<1x1x32xf32>
    %38 = vector.shape_cast %37 : vector<1x1x32xf32> to vector<1x32xf32>
    %cst_46 = arith.constant dense<0.000000e+00> : vector<16xf32>
    %39 = vector.multi_reduction <add>, %8, %cst_46 [1] : vector<16x32xf32> to vector<16xf32>
    %40 = vector.shape_cast %39 : vector<16xf32> to vector<16x1xf32>
    %cst_47 = arith.constant 3.200000e+01 : f32
    %41 = vector.broadcast %cst_47 : f32 to vector<16x1xf32>
    %42 = arith.divf %40, %41 : vector<16x1xf32>
    %43 = vector.broadcast %42 : vector<16x1xf32> to vector<16x32xf32>
    %44 = arith.subf %8, %43 : vector<16x32xf32>
    %45 = arith.mulf %44, %44 : vector<16x32xf32>
    %cst_48 = arith.constant dense<0.000000e+00> : vector<16xf32>
    %46 = vector.multi_reduction <add>, %45, %cst_48 [1] : vector<16x32xf32> to vector<16xf32>
    %47 = vector.shape_cast %46 : vector<16xf32> to vector<16x1xf32>
    %cst_49 = arith.constant 3.200000e+01 : f32
    %48 = vector.broadcast %cst_49 : f32 to vector<16x1xf32>
    %49 = arith.divf %47, %48 : vector<16x1xf32>
    %cst_50 = arith.constant 9.99999974E-6 : f32
    %50 = vector.broadcast %cst_50 : f32 to vector<16x1xf32>
    %51 = arith.addf %49, %50 : vector<16x1xf32>
    %52 = math.rsqrt %51 : vector<16x1xf32>
    %53 = vector.broadcast %52 : vector<16x1xf32> to vector<16x32xf32>
    %54 = arith.mulf %44, %53 : vector<16x32xf32>
    %55 = vector.broadcast %16 : vector<1x32xf32> to vector<16x32xf32>
    %56 = arith.mulf %54, %55 : vector<16x32xf32>
    %57 = vector.broadcast %18 : vector<1x32xf32> to vector<16x32xf32>
    %58 = arith.addf %56, %57 : vector<16x32xf32>
    %cst_51 = arith.constant dense<0.000000e+00> : vector<16x96xf32>
    %59 = tpu.matmul %58, %20, %cst_51 {dimension_numbers = #tpu.dot_dimension_numbers<[1], [0], [0], [1], [0, 0, 1, 1], [], []>} : vector<16x32xf32>, vector<32x96xf32>, vector<16x96xf32> -> vector<16x96xf32>
    %60 = vector.broadcast %22 : vector<1x96xf32> to vector<16x96xf32>
    %61 = arith.addf %59, %60 : vector<16x96xf32>
    %62 = vector.extract_strided_slice %61 {offsets = [0, 0], sizes = [16, 32], strides = [1, 1]} : vector<16x96xf32> to vector<16x32xf32>
    %cst_52 = arith.constant 2.500000e-01 : f32
    %63 = vector.broadcast %cst_52 : f32 to vector<16x32xf32>
    %64 = arith.mulf %62, %63 : vector<16x32xf32>
    %65 = vector.extract_strided_slice %61 {offsets = [0, 32], sizes = [16, 32], strides = [1, 1]} : vector<16x96xf32> to vector<16x32xf32>
    %66 = vector.extract_strided_slice %61 {offsets = [0, 64], sizes = [16, 32], strides = [1, 1]} : vector<16x96xf32> to vector<16x32xf32>
    %67 = vector.extract_strided_slice %64 {offsets = [0, 0], sizes = [16, 16], strides = [1, 1]} : vector<16x32xf32> to vector<16x16xf32>
    %68 = vector.extract_strided_slice %65 {offsets = [0, 0], sizes = [16, 16], strides = [1, 1]} : vector<16x32xf32> to vector<16x16xf32>
    %69 = vector.extract_strided_slice %66 {offsets = [0, 0], sizes = [16, 16], strides = [1, 1]} : vector<16x32xf32> to vector<16x16xf32>
    %cst_53 = arith.constant dense<0.000000e+00> : vector<16x16xf32>
    %70 = tpu.matmul %67, %68, %cst_53 {dimension_numbers = #tpu.dot_dimension_numbers<[1], [1], [0], [0], [0, 0, 1, 0], [], []>} : vector<16x16xf32>, vector<16x16xf32>, vector<16x16xf32> -> vector<16x16xf32>
    %71 = arith.addf %70, %14 : vector<16x16xf32>
    %cst_54 = arith.constant dense<0xFF800000> : vector<16xf32>
    %72 = vector.multi_reduction <maximumf>, %71, %cst_54 [1] : vector<16x16xf32> to vector<16xf32>
    %73 = vector.shape_cast %72 : vector<16xf32> to vector<16x1xf32>
    %74 = vector.broadcast %73 : vector<16x1xf32> to vector<16x16xf32>
    %75 = arith.subf %71, %74 : vector<16x16xf32>
    %76 = math.exp %75 : vector<16x16xf32>
    %cst_55 = arith.constant dense<0.000000e+00> : vector<16xf32>
    %77 = vector.multi_reduction <add>, %76, %cst_55 [1] : vector<16x16xf32> to vector<16xf32>
    %78 = vector.shape_cast %77 : vector<16xf32> to vector<16x1xf32>
    %79 = tpu.reciprocal %78 {approx = true} : vector<16x1xf32> -> vector<16x1xf32>
    %80 = vector.broadcast %79 : vector<16x1xf32> to vector<16x16xf32>
    %81 = arith.mulf %76, %80 : vector<16x16xf32>
    %cst_56 = arith.constant dense<0.000000e+00> : vector<16x16xf32>
    %82 = tpu.matmul %81, %69, %cst_56 {dimension_numbers = #tpu.dot_dimension_numbers<[1], [0], [0], [1], [0, 0, 1, 1], [], []>} : vector<16x16xf32>, vector<16x16xf32>, vector<16x16xf32> -> vector<16x16xf32>
    %83 = vector.extract_strided_slice %24 {offsets = [0, 0], sizes = [16, 32], strides = [1, 1]} : vector<32x32xf32> to vector<16x32xf32>
    %cst_57 = arith.constant dense<0.000000e+00> : vector<16x32xf32>
    %84 = tpu.matmul %82, %83, %cst_57 {dimension_numbers = #tpu.dot_dimension_numbers<[1], [0], [0], [1], [0, 0, 1, 1], [], []>} : vector<16x16xf32>, vector<16x32xf32>, vector<16x32xf32> -> vector<16x32xf32>
    %85 = vector.broadcast %26 : vector<1x32xf32> to vector<16x32xf32>
    %86 = arith.addf %85, %84 : vector<16x32xf32>
    %87 = vector.extract_strided_slice %64 {offsets = [0, 16], sizes = [16, 16], strides = [1, 1]} : vector<16x32xf32> to vector<16x16xf32>
    %88 = vector.extract_strided_slice %65 {offsets = [0, 16], sizes = [16, 16], strides = [1, 1]} : vector<16x32xf32> to vector<16x16xf32>
    %89 = vector.extract_strided_slice %66 {offsets = [0, 16], sizes = [16, 16], strides = [1, 1]} : vector<16x32xf32> to vector<16x16xf32>
    %cst_58 = arith.constant dense<0.000000e+00> : vector<16x16xf32>
    %90 = tpu.matmul %87, %88, %cst_58 {dimension_numbers = #tpu.dot_dimension_numbers<[1], [1], [0], [0], [0, 0, 1, 0], [], []>} : vector<16x16xf32>, vector<16x16xf32>, vector<16x16xf32> -> vector<16x16xf32>
    %91 = arith.addf %90, %14 : vector<16x16xf32>
    %cst_59 = arith.constant dense<0xFF800000> : vector<16xf32>
    %92 = vector.multi_reduction <maximumf>, %91, %cst_59 [1] : vector<16x16xf32> to vector<16xf32>
    %93 = vector.shape_cast %92 : vector<16xf32> to vector<16x1xf32>
    %94 = vector.broadcast %93 : vector<16x1xf32> to vector<16x16xf32>
    %95 = arith.subf %91, %94 : vector<16x16xf32>
    %96 = math.exp %95 : vector<16x16xf32>
    %cst_60 = arith.constant dense<0.000000e+00> : vector<16xf32>
    %97 = vector.multi_reduction <add>, %96, %cst_60 [1] : vector<16x16xf32> to vector<16xf32>
    %98 = vector.shape_cast %97 : vector<16xf32> to vector<16x1xf32>
    %99 = tpu.reciprocal %98 {approx = true} : vector<16x1xf32> -> vector<16x1xf32>
    %100 = vector.broadcast %99 : vector<16x1xf32> to vector<16x16xf32>
    %101 = arith.mulf %96, %100 : vector<16x16xf32>
    %cst_61 = arith.constant dense<0.000000e+00> : vector<16x16xf32>
    %102 = tpu.matmul %101, %89, %cst_61 {dimension_numbers = #tpu.dot_dimension_numbers<[1], [0], [0], [1], [0, 0, 1, 1], [], []>} : vector<16x16xf32>, vector<16x16xf32>, vector<16x16xf32> -> vector<16x16xf32>
    %103 = vector.extract_strided_slice %24 {offsets = [16, 0], sizes = [16, 32], strides = [1, 1]} : vector<32x32xf32> to vector<16x32xf32>
    %cst_62 = arith.constant dense<0.000000e+00> : vector<16x32xf32>
    %104 = tpu.matmul %102, %103, %cst_62 {dimension_numbers = #tpu.dot_dimension_numbers<[1], [0], [0], [1], [0, 0, 1, 1], [], []>} : vector<16x16xf32>, vector<16x32xf32>, vector<16x32xf32> -> vector<16x32xf32>
    %105 = arith.addf %86, %104 : vector<16x32xf32>
    %106 = arith.addf %8, %105 : vector<16x32xf32>
    %cst_63 = arith.constant dense<0.000000e+00> : vector<16xf32>
    %107 = vector.multi_reduction <add>, %106, %cst_63 [1] : vector<16x32xf32> to vector<16xf32>
    %108 = vector.shape_cast %107 : vector<16xf32> to vector<16x1xf32>
    %cst_64 = arith.constant 3.200000e+01 : f32
    %109 = vector.broadcast %cst_64 : f32 to vector<16x1xf32>
    %110 = arith.divf %108, %109 : vector<16x1xf32>
    %111 = vector.broadcast %110 : vector<16x1xf32> to vector<16x32xf32>
    %112 = arith.subf %106, %111 : vector<16x32xf32>
    %113 = arith.mulf %112, %112 : vector<16x32xf32>
    %cst_65 = arith.constant dense<0.000000e+00> : vector<16xf32>
    %114 = vector.multi_reduction <add>, %113, %cst_65 [1] : vector<16x32xf32> to vector<16xf32>
    %115 = vector.shape_cast %114 : vector<16xf32> to vector<16x1xf32>
    %cst_66 = arith.constant 3.200000e+01 : f32
    %116 = vector.broadcast %cst_66 : f32 to vector<16x1xf32>
    %117 = arith.divf %115, %116 : vector<16x1xf32>
    %cst_67 = arith.constant 9.99999974E-6 : f32
    %118 = vector.broadcast %cst_67 : f32 to vector<16x1xf32>
    %119 = arith.addf %117, %118 : vector<16x1xf32>
    %120 = math.rsqrt %119 : vector<16x1xf32>
    %121 = vector.broadcast %120 : vector<16x1xf32> to vector<16x32xf32>
    %122 = arith.mulf %112, %121 : vector<16x32xf32>
    %123 = vector.broadcast %28 : vector<1x32xf32> to vector<16x32xf32>
    %124 = arith.mulf %122, %123 : vector<16x32xf32>
    %125 = vector.broadcast %30 : vector<1x32xf32> to vector<16x32xf32>
    %126 = arith.addf %124, %125 : vector<16x32xf32>
    %cst_68 = arith.constant dense<0.000000e+00> : vector<16x128xf32>
    %127 = tpu.matmul %126, %32, %cst_68 {dimension_numbers = #tpu.dot_dimension_numbers<[1], [0], [0], [1], [0, 0, 1, 1], [], []>} : vector<16x32xf32>, vector<32x128xf32>, vector<16x128xf32> -> vector<16x128xf32>
    %128 = vector.broadcast %34 : vector<1x128xf32> to vector<16x128xf32>
    %129 = arith.addf %127, %128 : vector<16x128xf32>
    %cst_69 = arith.constant 5.000000e-01 : f32
    %130 = vector.broadcast %cst_69 : f32 to vector<16x128xf32>
    %131 = arith.mulf %130, %129 : vector<16x128xf32>
    %cst_70 = arith.constant 4.471500e-02 : f32
    %132 = vector.broadcast %cst_70 : f32 to vector<16x128xf32>
    %133 = arith.mulf %132, %129 : vector<16x128xf32>
    %134 = arith.mulf %133, %129 : vector<16x128xf32>
    %135 = arith.mulf %134, %129 : vector<16x128xf32>
    %136 = arith.addf %129, %135 : vector<16x128xf32>
    %cst_71 = arith.constant 0.797884583 : f32
    %137 = vector.broadcast %cst_71 : f32 to vector<16x128xf32>
    %138 = arith.mulf %137, %136 : vector<16x128xf32>
    %139 = math.tanh %138 : vector<16x128xf32>
    %cst_72 = arith.constant 1.000000e+00 : f32
    %140 = vector.broadcast %cst_72 : f32 to vector<16x128xf32>
    %141 = arith.addf %140, %139 : vector<16x128xf32>
    %142 = arith.mulf %131, %141 : vector<16x128xf32>
    %cst_73 = arith.constant dense<0.000000e+00> : vector<16x32xf32>
    %143 = tpu.matmul %142, %36, %cst_73 {dimension_numbers = #tpu.dot_dimension_numbers<[1], [0], [0], [1], [0, 0, 1, 1], [], []>} : vector<16x128xf32>, vector<128x32xf32>, vector<16x32xf32> -> vector<16x32xf32>
    %144 = vector.broadcast %38 : vector<1x32xf32> to vector<16x32xf32>
    %145 = arith.addf %143, %144 : vector<16x32xf32>
    %146 = arith.addf %106, %145 : vector<16x32xf32>
    %c1 = arith.constant 1 : index
    %c0_74 = arith.constant 0 : index
    %c0_75 = arith.constant 0 : index
    %147 = vector.load %arg5[%c1, %c0_74, %c0_75] : memref<2x1x32xf32, #tpu.memory_space<vmem>>, vector<1x1x32xf32>
    %148 = vector.shape_cast %147 : vector<1x1x32xf32> to vector<1x32xf32>
    %c1_76 = arith.constant 1 : index
    %c0_77 = arith.constant 0 : index
    %c0_78 = arith.constant 0 : index
    %149 = vector.load %arg6[%c1_76, %c0_77, %c0_78] : memref<2x1x32xf32, #tpu.memory_space<vmem>>, vector<1x1x32xf32>
    %150 = vector.shape_cast %149 : vector<1x1x32xf32> to vector<1x32xf32>
    %c1_79 = arith.constant 1 : index
    %c0_80 = arith.constant 0 : index
    %c0_81 = arith.constant 0 : index
    %151 = vector.load %arg7[%c1_79, %c0_80, %c0_81] : memref<2x32x96xf32, #tpu.memory_space<vmem>>, vector<1x32x96xf32>
    %152 = vector.shape_cast %151 : vector<1x32x96xf32> to vector<32x96xf32>
    %c1_82 = arith.constant 1 : index
    %c0_83 = arith.constant 0 : index
    %c0_84 = arith.constant 0 : index
    %153 = vector.load %arg8[%c1_82, %c0_83, %c0_84] : memref<2x1x96xf32, #tpu.memory_space<vmem>>, vector<1x1x96xf32>
    %154 = vector.shape_cast %153 : vector<1x1x96xf32> to vector<1x96xf32>
    %c1_85 = arith.constant 1 : index
    %c0_86 = arith.constant 0 : index
    %c0_87 = arith.constant 0 : index
    %155 = vector.load %arg9[%c1_85, %c0_86, %c0_87] : memref<2x32x32xf32, #tpu.memory_space<vmem>>, vector<1x32x32xf32>
    %156 = vector.shape_cast %155 : vector<1x32x32xf32> to vector<32x32xf32>
    %c1_88 = arith.constant 1 : index
    %c0_89 = arith.constant 0 : index
    %c0_90 = arith.constant 0 : index
    %157 = vector.load %arg10[%c1_88, %c0_89, %c0_90] : memref<2x1x32xf32, #tpu.memory_space<vmem>>, vector<1x1x32xf32>
    %158 = vector.shape_cast %157 : vector<1x1x32xf32> to vector<1x32xf32>
    %c1_91 = arith.constant 1 : index
    %c0_92 = arith.constant 0 : index
    %c0_93 = arith.constant 0 : index
    %159 = vector.load %arg11[%c1_91, %c0_92, %c0_93] : memref<2x1x32xf32, #tpu.memory_space<vmem>>, vector<1x1x32xf32>
    %160 = vector.shape_cast %159 : vector<1x1x32xf32> to vector<1x32xf32>
    %c1_94 = arith.constant 1 : index
    %c0_95 = arith.constant 0 : index
    %c0_96 = arith.constant 0 : index
    %161 = vector.load %arg12[%c1_94, %c0_95, %c0_96] : memref<2x1x32xf32, #tpu.memory_space<vmem>>, vector<1x1x32xf32>
    %162 = vector.shape_cast %161 : vector<1x1x32xf32> to vector<1x32xf32>
    %c1_97 = arith.constant 1 : index
    %c0_98 = arith.constant 0 : index
    %c0_99 = arith.constant 0 : index
    %163 = vector.load %arg13[%c1_97, %c0_98, %c0_99] : memref<2x32x128xf32, #tpu.memory_space<vmem>>, vector<1x32x128xf32>
    %164 = vector.shape_cast %163 : vector<1x32x128xf32> to vector<32x128xf32>
    %c1_100 = arith.constant 1 : index
    %c0_101 = arith.constant 0 : index
    %c0_102 = arith.constant 0 : index
    %165 = vector.load %arg14[%c1_100, %c0_101, %c0_102] : memref<2x1x128xf32, #tpu.memory_space<vmem>>, vector<1x1x128xf32>
    %166 = vector.shape_cast %165 : vector<1x1x128xf32> to vector<1x128xf32>
    %c1_103 = arith.constant 1 : index
    %c0_104 = arith.constant 0 : index
    %c0_105 = arith.constant 0 : index
    %167 = vector.load %arg15[%c1_103, %c0_104, %c0_105] : memref<2x128x32xf32, #tpu.memory_space<vmem>>, vector<1x128x32xf32>
    %168 = vector.shape_cast %167 : vector<1x128x32xf32> to vector<128x32xf32>
    %c1_106 = arith.constant 1 : index
    %c0_107 = arith.constant 0 : index
    %c0_108 = arith.constant 0 : index
    %169 = vector.load %arg16[%c1_106, %c0_107, %c0_108] : memref<2x1x32xf32, #tpu.memory_space<vmem>>, vector<1x1x32xf32>
    %170 = vector.shape_cast %169 : vector<1x1x32xf32> to vector<1x32xf32>
    %cst_109 = arith.constant dense<0.000000e+00> : vector<16xf32>
    %171 = vector.multi_reduction <add>, %146, %cst_109 [1] : vector<16x32xf32> to vector<16xf32>
    %172 = vector.shape_cast %171 : vector<16xf32> to vector<16x1xf32>
    %cst_110 = arith.constant 3.200000e+01 : f32
    %173 = vector.broadcast %cst_110 : f32 to vector<16x1xf32>
    %174 = arith.divf %172, %173 : vector<16x1xf32>
    %175 = vector.broadcast %174 : vector<16x1xf32> to vector<16x32xf32>
    %176 = arith.subf %146, %175 : vector<16x32xf32>
    %177 = arith.mulf %176, %176 : vector<16x32xf32>
    %cst_111 = arith.constant dense<0.000000e+00> : vector<16xf32>
    %178 = vector.multi_reduction <add>, %177, %cst_111 [1] : vector<16x32xf32> to vector<16xf32>
    %179 = vector.shape_cast %178 : vector<16xf32> to vector<16x1xf32>
    %cst_112 = arith.constant 3.200000e+01 : f32
    %180 = vector.broadcast %cst_112 : f32 to vector<16x1xf32>
    %181 = arith.divf %179, %180 : vector<16x1xf32>
    %cst_113 = arith.constant 9.99999974E-6 : f32
    %182 = vector.broadcast %cst_113 : f32 to vector<16x1xf32>
    %183 = arith.addf %181, %182 : vector<16x1xf32>
    %184 = math.rsqrt %183 : vector<16x1xf32>
    %185 = vector.broadcast %184 : vector<16x1xf32> to vector<16x32xf32>
    %186 = arith.mulf %176, %185 : vector<16x32xf32>
    %187 = vector.broadcast %148 : vector<1x32xf32> to vector<16x32xf32>
    %188 = arith.mulf %186, %187 : vector<16x32xf32>
    %189 = vector.broadcast %150 : vector<1x32xf32> to vector<16x32xf32>
    %190 = arith.addf %188, %189 : vector<16x32xf32>
    %cst_114 = arith.constant dense<0.000000e+00> : vector<16x96xf32>
    %191 = tpu.matmul %190, %152, %cst_114 {dimension_numbers = #tpu.dot_dimension_numbers<[1], [0], [0], [1], [0, 0, 1, 1], [], []>} : vector<16x32xf32>, vector<32x96xf32>, vector<16x96xf32> -> vector<16x96xf32>
    %192 = vector.broadcast %154 : vector<1x96xf32> to vector<16x96xf32>
    %193 = arith.addf %191, %192 : vector<16x96xf32>
    %194 = vector.extract_strided_slice %193 {offsets = [0, 0], sizes = [16, 32], strides = [1, 1]} : vector<16x96xf32> to vector<16x32xf32>
    %cst_115 = arith.constant 2.500000e-01 : f32
    %195 = vector.broadcast %cst_115 : f32 to vector<16x32xf32>
    %196 = arith.mulf %194, %195 : vector<16x32xf32>
    %197 = vector.extract_strided_slice %193 {offsets = [0, 32], sizes = [16, 32], strides = [1, 1]} : vector<16x96xf32> to vector<16x32xf32>
    %198 = vector.extract_strided_slice %193 {offsets = [0, 64], sizes = [16, 32], strides = [1, 1]} : vector<16x96xf32> to vector<16x32xf32>
    %199 = vector.extract_strided_slice %196 {offsets = [0, 0], sizes = [16, 16], strides = [1, 1]} : vector<16x32xf32> to vector<16x16xf32>
    %200 = vector.extract_strided_slice %197 {offsets = [0, 0], sizes = [16, 16], strides = [1, 1]} : vector<16x32xf32> to vector<16x16xf32>
    %201 = vector.extract_strided_slice %198 {offsets = [0, 0], sizes = [16, 16], strides = [1, 1]} : vector<16x32xf32> to vector<16x16xf32>
    %cst_116 = arith.constant dense<0.000000e+00> : vector<16x16xf32>
    %202 = tpu.matmul %199, %200, %cst_116 {dimension_numbers = #tpu.dot_dimension_numbers<[1], [1], [0], [0], [0, 0, 1, 0], [], []>} : vector<16x16xf32>, vector<16x16xf32>, vector<16x16xf32> -> vector<16x16xf32>
    %203 = arith.addf %202, %14 : vector<16x16xf32>
    %cst_117 = arith.constant dense<0xFF800000> : vector<16xf32>
    %204 = vector.multi_reduction <maximumf>, %203, %cst_117 [1] : vector<16x16xf32> to vector<16xf32>
    %205 = vector.shape_cast %204 : vector<16xf32> to vector<16x1xf32>
    %206 = vector.broadcast %205 : vector<16x1xf32> to vector<16x16xf32>
    %207 = arith.subf %203, %206 : vector<16x16xf32>
    %208 = math.exp %207 : vector<16x16xf32>
    %cst_118 = arith.constant dense<0.000000e+00> : vector<16xf32>
    %209 = vector.multi_reduction <add>, %208, %cst_118 [1] : vector<16x16xf32> to vector<16xf32>
    %210 = vector.shape_cast %209 : vector<16xf32> to vector<16x1xf32>
    %211 = tpu.reciprocal %210 {approx = true} : vector<16x1xf32> -> vector<16x1xf32>
    %212 = vector.broadcast %211 : vector<16x1xf32> to vector<16x16xf32>
    %213 = arith.mulf %208, %212 : vector<16x16xf32>
    %cst_119 = arith.constant dense<0.000000e+00> : vector<16x16xf32>
    %214 = tpu.matmul %213, %201, %cst_119 {dimension_numbers = #tpu.dot_dimension_numbers<[1], [0], [0], [1], [0, 0, 1, 1], [], []>} : vector<16x16xf32>, vector<16x16xf32>, vector<16x16xf32> -> vector<16x16xf32>
    %215 = vector.extract_strided_slice %156 {offsets = [0, 0], sizes = [16, 32], strides = [1, 1]} : vector<32x32xf32> to vector<16x32xf32>
    %cst_120 = arith.constant dense<0.000000e+00> : vector<16x32xf32>
    %216 = tpu.matmul %214, %215, %cst_120 {dimension_numbers = #tpu.dot_dimension_numbers<[1], [0], [0], [1], [0, 0, 1, 1], [], []>} : vector<16x16xf32>, vector<16x32xf32>, vector<16x32xf32> -> vector<16x32xf32>
    %217 = vector.broadcast %158 : vector<1x32xf32> to vector<16x32xf32>
    %218 = arith.addf %217, %216 : vector<16x32xf32>
    %219 = vector.extract_strided_slice %196 {offsets = [0, 16], sizes = [16, 16], strides = [1, 1]} : vector<16x32xf32> to vector<16x16xf32>
    %220 = vector.extract_strided_slice %197 {offsets = [0, 16], sizes = [16, 16], strides = [1, 1]} : vector<16x32xf32> to vector<16x16xf32>
    %221 = vector.extract_strided_slice %198 {offsets = [0, 16], sizes = [16, 16], strides = [1, 1]} : vector<16x32xf32> to vector<16x16xf32>
    %cst_121 = arith.constant dense<0.000000e+00> : vector<16x16xf32>
    %222 = tpu.matmul %219, %220, %cst_121 {dimension_numbers = #tpu.dot_dimension_numbers<[1], [1], [0], [0], [0, 0, 1, 0], [], []>} : vector<16x16xf32>, vector<16x16xf32>, vector<16x16xf32> -> vector<16x16xf32>
    %223 = arith.addf %222, %14 : vector<16x16xf32>
    %cst_122 = arith.constant dense<0xFF800000> : vector<16xf32>
    %224 = vector.multi_reduction <maximumf>, %223, %cst_122 [1] : vector<16x16xf32> to vector<16xf32>
    %225 = vector.shape_cast %224 : vector<16xf32> to vector<16x1xf32>
    %226 = vector.broadcast %225 : vector<16x1xf32> to vector<16x16xf32>
    %227 = arith.subf %223, %226 : vector<16x16xf32>
    %228 = math.exp %227 : vector<16x16xf32>
    %cst_123 = arith.constant dense<0.000000e+00> : vector<16xf32>
    %229 = vector.multi_reduction <add>, %228, %cst_123 [1] : vector<16x16xf32> to vector<16xf32>
    %230 = vector.shape_cast %229 : vector<16xf32> to vector<16x1xf32>
    %231 = tpu.reciprocal %230 {approx = true} : vector<16x1xf32> -> vector<16x1xf32>
    %232 = vector.broadcast %231 : vector<16x1xf32> to vector<16x16xf32>
    %233 = arith.mulf %228, %232 : vector<16x16xf32>
    %cst_124 = arith.constant dense<0.000000e+00> : vector<16x16xf32>
    %234 = tpu.matmul %233, %221, %cst_124 {dimension_numbers = #tpu.dot_dimension_numbers<[1], [0], [0], [1], [0, 0, 1, 1], [], []>} : vector<16x16xf32>, vector<16x16xf32>, vector<16x16xf32> -> vector<16x16xf32>
    %235 = vector.extract_strided_slice %156 {offsets = [16, 0], sizes = [16, 32], strides = [1, 1]} : vector<32x32xf32> to vector<16x32xf32>
    %cst_125 = arith.constant dense<0.000000e+00> : vector<16x32xf32>
    %236 = tpu.matmul %234, %235, %cst_125 {dimension_numbers = #tpu.dot_dimension_numbers<[1], [0], [0], [1], [0, 0, 1, 1], [], []>} : vector<16x16xf32>, vector<16x32xf32>, vector<16x32xf32> -> vector<16x32xf32>
    %237 = arith.addf %218, %236 : vector<16x32xf32>
    %238 = arith.addf %146, %237 : vector<16x32xf32>
    %cst_126 = arith.constant dense<0.000000e+00> : vector<16xf32>
    %239 = vector.multi_reduction <add>, %238, %cst_126 [1] : vector<16x32xf32> to vector<16xf32>
    %240 = vector.shape_cast %239 : vector<16xf32> to vector<16x1xf32>
    %cst_127 = arith.constant 3.200000e+01 : f32
    %241 = vector.broadcast %cst_127 : f32 to vector<16x1xf32>
    %242 = arith.divf %240, %241 : vector<16x1xf32>
    %243 = vector.broadcast %242 : vector<16x1xf32> to vector<16x32xf32>
    %244 = arith.subf %238, %243 : vector<16x32xf32>
    %245 = arith.mulf %244, %244 : vector<16x32xf32>
    %cst_128 = arith.constant dense<0.000000e+00> : vector<16xf32>
    %246 = vector.multi_reduction <add>, %245, %cst_128 [1] : vector<16x32xf32> to vector<16xf32>
    %247 = vector.shape_cast %246 : vector<16xf32> to vector<16x1xf32>
    %cst_129 = arith.constant 3.200000e+01 : f32
    %248 = vector.broadcast %cst_129 : f32 to vector<16x1xf32>
    %249 = arith.divf %247, %248 : vector<16x1xf32>
    %cst_130 = arith.constant 9.99999974E-6 : f32
    %250 = vector.broadcast %cst_130 : f32 to vector<16x1xf32>
    %251 = arith.addf %249, %250 : vector<16x1xf32>
    %252 = math.rsqrt %251 : vector<16x1xf32>
    %253 = vector.broadcast %252 : vector<16x1xf32> to vector<16x32xf32>
    %254 = arith.mulf %244, %253 : vector<16x32xf32>
    %255 = vector.broadcast %160 : vector<1x32xf32> to vector<16x32xf32>
    %256 = arith.mulf %254, %255 : vector<16x32xf32>
    %257 = vector.broadcast %162 : vector<1x32xf32> to vector<16x32xf32>
    %258 = arith.addf %256, %257 : vector<16x32xf32>
    %cst_131 = arith.constant dense<0.000000e+00> : vector<16x128xf32>
    %259 = tpu.matmul %258, %164, %cst_131 {dimension_numbers = #tpu.dot_dimension_numbers<[1], [0], [0], [1], [0, 0, 1, 1], [], []>} : vector<16x32xf32>, vector<32x128xf32>, vector<16x128xf32> -> vector<16x128xf32>
    %260 = vector.broadcast %166 : vector<1x128xf32> to vector<16x128xf32>
    %261 = arith.addf %259, %260 : vector<16x128xf32>
    %cst_132 = arith.constant 5.000000e-01 : f32
    %262 = vector.broadcast %cst_132 : f32 to vector<16x128xf32>
    %263 = arith.mulf %262, %261 : vector<16x128xf32>
    %cst_133 = arith.constant 4.471500e-02 : f32
    %264 = vector.broadcast %cst_133 : f32 to vector<16x128xf32>
    %265 = arith.mulf %264, %261 : vector<16x128xf32>
    %266 = arith.mulf %265, %261 : vector<16x128xf32>
    %267 = arith.mulf %266, %261 : vector<16x128xf32>
    %268 = arith.addf %261, %267 : vector<16x128xf32>
    %cst_134 = arith.constant 0.797884583 : f32
    %269 = vector.broadcast %cst_134 : f32 to vector<16x128xf32>
    %270 = arith.mulf %269, %268 : vector<16x128xf32>
    %271 = math.tanh %270 : vector<16x128xf32>
    %cst_135 = arith.constant 1.000000e+00 : f32
    %272 = vector.broadcast %cst_135 : f32 to vector<16x128xf32>
    %273 = arith.addf %272, %271 : vector<16x128xf32>
    %274 = arith.mulf %263, %273 : vector<16x128xf32>
    %cst_136 = arith.constant dense<0.000000e+00> : vector<16x32xf32>
    %275 = tpu.matmul %274, %168, %cst_136 {dimension_numbers = #tpu.dot_dimension_numbers<[1], [0], [0], [1], [0, 0, 1, 1], [], []>} : vector<16x128xf32>, vector<128x32xf32>, vector<16x32xf32> -> vector<16x32xf32>
    %276 = vector.broadcast %170 : vector<1x32xf32> to vector<16x32xf32>
    %277 = arith.addf %275, %276 : vector<16x32xf32>
    %278 = arith.addf %238, %277 : vector<16x32xf32>
    %c0_137 = arith.constant 0 : index
    %c0_138 = arith.constant 0 : index
    %279 = vector.load %arg22[%c0_137, %c0_138] : memref<16x32xf32, #tpu.memory_space<vmem>>, vector<16x32xf32>
    tpu.vector_store %arg22[%c0_137, %c0_138], %278 {strides = array<i32>} : memref<16x32xf32, #tpu.memory_space<vmem>>, vector<16x32xf32>,
    %c0_139 = arith.constant 0 : index
    %c0_140 = arith.constant 0 : index
    %280 = tpu.strided_load %arg22[%c0_139, %c0_140] {strides = array<i32: 2, 1>} : memref<16x32xf32, #tpu.memory_space<vmem>>, vector<8x32xf32>
    %c0_141 = arith.constant 0 : index
    %c0_142 = arith.constant 0 : index
    %281 = vector.load %arg17[%c0_141, %c0_142] : memref<1x32xf32, #tpu.memory_space<vmem>>, vector<1x32xf32>
    %c0_143 = arith.constant 0 : index
    %c0_144 = arith.constant 0 : index
    %282 = vector.load %arg18[%c0_143, %c0_144] : memref<1x32xf32, #tpu.memory_space<vmem>>, vector<1x32xf32>
    %cst_145 = arith.constant dense<0.000000e+00> : vector<8xf32>
    %283 = vector.multi_reduction <add>, %280, %cst_145 [1] : vector<8x32xf32> to vector<8xf32>
    %284 = vector.shape_cast %283 : vector<8xf32> to vector<8x1xf32>
    %cst_146 = arith.constant 3.200000e+01 : f32
    %285 = vector.broadcast %cst_146 : f32 to vector<8x1xf32>
    %286 = arith.divf %284, %285 : vector<8x1xf32>
    %287 = vector.broadcast %286 : vector<8x1xf32> to vector<8x32xf32>
    %288 = arith.subf %280, %287 : vector<8x32xf32>
    %289 = arith.mulf %288, %288 : vector<8x32xf32>
    %cst_147 = arith.constant dense<0.000000e+00> : vector<8xf32>
    %290 = vector.multi_reduction <add>, %289, %cst_147 [1] : vector<8x32xf32> to vector<8xf32>
    %291 = vector.shape_cast %290 : vector<8xf32> to vector<8x1xf32>
    %cst_148 = arith.constant 3.200000e+01 : f32
    %292 = vector.broadcast %cst_148 : f32 to vector<8x1xf32>
    %293 = arith.divf %291, %292 : vector<8x1xf32>
    %cst_149 = arith.constant 9.99999974E-6 : f32
    %294 = vector.broadcast %cst_149 : f32 to vector<8x1xf32>
    %295 = arith.addf %293, %294 : vector<8x1xf32>
    %296 = math.rsqrt %295 : vector<8x1xf32>
    %297 = vector.broadcast %296 : vector<8x1xf32> to vector<8x32xf32>
    %298 = arith.mulf %288, %297 : vector<8x32xf32>
    %299 = vector.broadcast %281 : vector<1x32xf32> to vector<8x32xf32>
    %300 = arith.mulf %298, %299 : vector<8x32xf32>
    %301 = vector.broadcast %282 : vector<1x32xf32> to vector<8x32xf32>
    %302 = arith.addf %300, %301 : vector<8x32xf32>
    %c0_150 = arith.constant 0 : index
    %c0_151 = arith.constant 0 : index
    %303 = vector.load %arg19[%c0_150, %c0_151] : memref<32x8xf32, #tpu.memory_space<vmem>>, vector<32x8xf32>
    %cst_152 = arith.constant dense<0.000000e+00> : vector<8x8xf32>
    %304 = tpu.matmul %302, %303, %cst_152 {dimension_numbers = #tpu.dot_dimension_numbers<[1], [0], [0], [1], [0, 0, 1, 1], [], []>} : vector<8x32xf32>, vector<32x8xf32>, vector<8x8xf32> -> vector<8x8xf32>
    %c0_153 = arith.constant 0 : index
    %c0_154 = arith.constant 0 : index
    %305 = vector.load %arg20[%c0_153, %c0_154] : memref<1x8xf32, #tpu.memory_space<vmem>>, vector<1x8xf32>
    %306 = vector.broadcast %305 : vector<1x8xf32> to vector<8x8xf32>
    %307 = arith.addf %304, %306 : vector<8x8xf32>
    %cst_155 = arith.constant 0.000000e+00 : f32
    %308 = vector.broadcast %cst_155 : f32 to vector<8x8xf32>
    %309 = arith.subf %308, %307 : vector<8x8xf32>
    %310 = math.exp %309 : vector<8x8xf32>
    %cst_156 = arith.constant 1.000000e+00 : f32
    %311 = vector.broadcast %cst_156 : f32 to vector<8x8xf32>
    %312 = arith.addf %311, %310 : vector<8x8xf32>
    %cst_157 = arith.constant 1.000000e+00 : f32
    %313 = vector.broadcast %cst_157 : f32 to vector<8x8xf32>
    %314 = arith.divf %313, %312 : vector<8x8xf32>
    %cst_158 = arith.constant 5.000000e-01 : f32
    %315 = vector.broadcast %cst_158 : f32 to vector<8x8xf32>
    %316 = arith.subf %314, %315 : vector<8x8xf32>
    %cst_159 = arith.constant 1.41421354 : f32
    %317 = vector.broadcast %cst_159 : f32 to vector<8x8xf32>
    %318 = arith.mulf %316, %317 : vector<8x8xf32>
    %c0_160 = arith.constant 0 : index
    %c0_161 = arith.constant 0 : index
    %c0_162 = arith.constant 0 : index
    %319 = vector.load %arg21[%c0_160, %c0_161, %c0_162] : memref<1x8x8xf32, #tpu.memory_space<vmem>>, vector<1x8x8xf32>
    %320 = vector.shape_cast %319 : vector<1x8x8xf32> to vector<8x8xf32>
    %321 = vector.shape_cast %318 : vector<8x8xf32> to vector<1x8x8xf32>
    tpu.vector_store %arg21[%c0_160, %c0_161, %c0_162], %321 {strides = array<i32>} : memref<1x8x8xf32, #tpu.memory_space<vmem>>, vector<1x8x8xf32>,
    return
  }
  func.func @transform_0(%arg0: i32) -> (i32, i32, i32) {
    %c0_i32 = arith.constant 0 : i32
    %c0_i32_0 = arith.constant 0 : i32
    %c0_i32_1 = arith.constant 0 : i32
    return %arg0, %c0_i32, %c0_i32_0 : i32, i32, i32
  }
  func.func @transform_1(%arg0: i32) -> (i32, i32) {
    %c0_i32 = arith.constant 0 : i32
    %c0_i32_0 = arith.constant 0 : i32
    %c0_i32_1 = arith.constant 0 : i32
    return %c0_i32, %c0_i32_0 : i32, i32
  }
  func.func @transform_2(%arg0: i32) -> (i32, i32) {
    %c0_i32 = arith.constant 0 : i32
    %c0_i32_0 = arith.constant 0 : i32
    %c0_i32_1 = arith.constant 0 : i32
    return %c0_i32, %c0_i32_0 : i32, i32
  }
  func.func @transform_3(%arg0: i32) -> (i32, i32) {
    %c0_i32 = arith.constant 0 : i32
    %c0_i32_0 = arith.constant 0 : i32
    %c0_i32_1 = arith.constant 0 : i32
    return %c0_i32, %c0_i32_0 : i32, i32
  }
  func.func @transform_4(%arg0: i32) -> (i32, i32, i32) {
    %c0_i32 = arith.constant 0 : i32
    %c0_i32_0 = arith.constant 0 : i32
    %c0_i32_1 = arith.constant 0 : i32
    %c0_i32_2 = arith.constant 0 : i32
    return %c0_i32, %c0_i32_0, %c0_i32_1 : i32, i32, i32
  }
  func.func @transform_5(%arg0: i32) -> (i32, i32, i32) {
    %c0_i32 = arith.constant 0 : i32
    %c0_i32_0 = arith.constant 0 : i32
    %c0_i32_1 = arith.constant 0 : i32
    %c0_i32_2 = arith.constant 0 : i32
    return %c0_i32, %c0_i32_0, %c0_i32_1 : i32, i32, i32
  }
  func.func @transform_6(%arg0: i32) -> (i32, i32, i32) {
    %c0_i32 = arith.constant 0 : i32
    %c0_i32_0 = arith.constant 0 : i32
    %c0_i32_1 = arith.constant 0 : i32
    %c0_i32_2 = arith.constant 0 : i32
    return %c0_i32, %c0_i32_0, %c0_i32_1 : i32, i32, i32
  }
  func.func @transform_7(%arg0: i32) -> (i32, i32, i32) {
    %c0_i32 = arith.constant 0 : i32
    %c0_i32_0 = arith.constant 0 : i32
    %c0_i32_1 = arith.constant 0 : i32
    %c0_i32_2 = arith.constant 0 : i32
    return %c0_i32, %c0_i32_0, %c0_i32_1 : i32, i32, i32
  }
  func.func @transform_8(%arg0: i32) -> (i32, i32, i32) {
    %c0_i32 = arith.constant 0 : i32
    %c0_i32_0 = arith.constant 0 : i32
    %c0_i32_1 = arith.constant 0 : i32
    %c0_i32_2 = arith.constant 0 : i32
    return %c0_i32, %c0_i32_0, %c0_i32_1 : i32, i32, i32
  }
  func.func @transform_9(%arg0: i32) -> (i32, i32, i32) {
    %c0_i32 = arith.constant 0 : i32
    %c0_i32_0 = arith.constant 0 : i32
    %c0_i32_1 = arith.constant 0 : i32
    %c0_i32_2 = arith.constant 0 : i32
    return %c0_i32, %c0_i32_0, %c0_i32_1 : i32, i32, i32
  }
  func.func @transform_10(%arg0: i32) -> (i32, i32, i32) {
    %c0_i32 = arith.constant 0 : i32
    %c0_i32_0 = arith.constant 0 : i32
    %c0_i32_1 = arith.constant 0 : i32
    %c0_i32_2 = arith.constant 0 : i32
    return %c0_i32, %c0_i32_0, %c0_i32_1 : i32, i32, i32
  }
  func.func @transform_11(%arg0: i32) -> (i32, i32, i32) {
    %c0_i32 = arith.constant 0 : i32
    %c0_i32_0 = arith.constant 0 : i32
    %c0_i32_1 = arith.constant 0 : i32
    %c0_i32_2 = arith.constant 0 : i32
    return %c0_i32, %c0_i32_0, %c0_i32_1 : i32, i32, i32
  }
  func.func @transform_12(%arg0: i32) -> (i32, i32, i32) {
    %c0_i32 = arith.constant 0 : i32
    %c0_i32_0 = arith.constant 0 : i32
    %c0_i32_1 = arith.constant 0 : i32
    %c0_i32_2 = arith.constant 0 : i32
    return %c0_i32, %c0_i32_0, %c0_i32_1 : i32, i32, i32
  }
  func.func @transform_13(%arg0: i32) -> (i32, i32, i32) {
    %c0_i32 = arith.constant 0 : i32
    %c0_i32_0 = arith.constant 0 : i32
    %c0_i32_1 = arith.constant 0 : i32
    %c0_i32_2 = arith.constant 0 : i32
    return %c0_i32, %c0_i32_0, %c0_i32_1 : i32, i32, i32
  }
  func.func @transform_14(%arg0: i32) -> (i32, i32, i32) {
    %c0_i32 = arith.constant 0 : i32
    %c0_i32_0 = arith.constant 0 : i32
    %c0_i32_1 = arith.constant 0 : i32
    %c0_i32_2 = arith.constant 0 : i32
    return %c0_i32, %c0_i32_0, %c0_i32_1 : i32, i32, i32
  }
  func.func @transform_15(%arg0: i32) -> (i32, i32, i32) {
    %c0_i32 = arith.constant 0 : i32
    %c0_i32_0 = arith.constant 0 : i32
    %c0_i32_1 = arith.constant 0 : i32
    %c0_i32_2 = arith.constant 0 : i32
    return %c0_i32, %c0_i32_0, %c0_i32_1 : i32, i32, i32
  }
  func.func @transform_16(%arg0: i32) -> (i32, i32) {
    %c0_i32 = arith.constant 0 : i32
    %c0_i32_0 = arith.constant 0 : i32
    %c0_i32_1 = arith.constant 0 : i32
    return %c0_i32, %c0_i32_0 : i32, i32
  }
  func.func @transform_17(%arg0: i32) -> (i32, i32) {
    %c0_i32 = arith.constant 0 : i32
    %c0_i32_0 = arith.constant 0 : i32
    %c0_i32_1 = arith.constant 0 : i32
    return %c0_i32, %c0_i32_0 : i32, i32
  }
  func.func @transform_18(%arg0: i32) -> (i32, i32) {
    %c0_i32 = arith.constant 0 : i32
    %c0_i32_0 = arith.constant 0 : i32
    %c0_i32_1 = arith.constant 0 : i32
    return %c0_i32, %c0_i32_0 : i32, i32
  }
  func.func @transform_19(%arg0: i32) -> (i32, i32) {
    %c0_i32 = arith.constant 0 : i32
    %c0_i32_0 = arith.constant 0 : i32
    %c0_i32_1 = arith.constant 0 : i32
    return %c0_i32, %c0_i32_0 : i32, i32
  }
  func.func @transform_20(%arg0: i32) -> (i32, i32, i32) {
    %c0_i32 = arith.constant 0 : i32
    %c0_i32_0 = arith.constant 0 : i32
    %c0_i32_1 = arith.constant 0 : i32
    return %arg0, %c0_i32, %c0_i32_0 : i32, i32, i32
  }
}

</mosaic_0001>

<llo_original>
// kernel: tpu_custom_call.1
$region0: #{tpu_custom_call.1}
  #allocation0 [shape = 'u32[]', space=smem, size = 0x4, offset = 0x4, fixed_abs, tag = 'smem constant byte address 0x4 - core index']
  #allocation1 [shape = 'u32[72,128]{1,0:T(1,128)}', space=vmem, size = 0x9000, scoped, tag = 'internal scratch']
  #allocation2 [shape = 'f32[16,32]{1,0:T(8,128)}', space=vmem, size = 0x2000, scoped, tag = 'scratch operand']
  %s0 = inlined_call_operand.vmem [shape: f32[2,16,8], index: 0, kind: input, shape index: {}]
  %s1 = inlined_call_operand.vmem [shape: f32[8,32], index: 1, kind: input, shape index: {}]
  %s2 = inlined_call_operand.vmem [shape: f32[1,32], index: 2, kind: input, shape index: {}]
  %s3 = inlined_call_operand.vmem [shape: f32[16,32], index: 3, kind: input, shape index: {}]
  %s4 = inlined_call_operand.vmem [shape: f32[2,1,32], index: 4, kind: input, shape index: {}]
  %s5 = inlined_call_operand.vmem [shape: f32[2,1,32], index: 5, kind: input, shape index: {}]
  %s6 = inlined_call_operand.vmem [shape: f32[2,32,96], index: 6, kind: input, shape index: {}]
  %s7 = inlined_call_operand.vmem [shape: f32[2,1,96], index: 7, kind: input, shape index: {}]
  %s8 = inlined_call_operand.vmem [shape: f32[2,32,32], index: 8, kind: input, shape index: {}]
  %s9 = inlined_call_operand.vmem [shape: f32[2,1,32], index: 9, kind: input, shape index: {}]
  %s10 = inlined_call_operand.vmem [shape: f32[2,1,32], index: 10, kind: input, shape index: {}]
  %s11 = inlined_call_operand.vmem [shape: f32[2,1,32], index: 11, kind: input, shape index: {}]
  %s12 = inlined_call_operand.vmem [shape: f32[2,32,128], index: 12, kind: input, shape index: {}]
  %s13 = inlined_call_operand.vmem [shape: f32[2,1,128], index: 13, kind: input, shape index: {}]
  %s14 = inlined_call_operand.vmem [shape: f32[2,128,32], index: 14, kind: input, shape index: {}]
  %s15 = inlined_call_operand.vmem [shape: f32[2,1,32], index: 15, kind: input, shape index: {}]
  %s16 = inlined_call_operand.vmem [shape: f32[1,32], index: 16, kind: input, shape index: {}]
  %s17 = inlined_call_operand.vmem [shape: f32[1,32], index: 17, kind: input, shape index: {}]
  %s18 = inlined_call_operand.vmem [shape: f32[32,8], index: 18, kind: input, shape index: {}]
  %s19 = inlined_call_operand.vmem [shape: f32[1,8], index: 19, kind: input, shape index: {}]
  %s20 = inlined_call_operand.hbm [shape: f32[2,8,8], index: 20, kind: output, shape index: {}]
  %s21 = sld [smem:[#allocation0]]
  $region113: #{tpu_custom_call.1} parent=0
    _
  %s23 = ssub.s32 1, %s21
  %s24 = scalar_select 0, %s23, %s21
  $region1: #{tpu_custom_call.1} parent=0
    #allocation3 [shape = 'u8[8192]{0}', space=vmem, size = 0x2000, scoped, tag = 'output window, operand 0']
    #allocation4 [shape = 's32[2]{0}', space=sflag, size = 0x8, scoped, tag = 'scoped memory for tpu_custom_call.1']
    %25 = vsyncpa [#allocation4], 0
    %s26 = scalar_lea.sflag [#allocation4], 1
    %27 = vsyncpa %s26, 0
    loop: start=0, step=1, limit=4
    $region2: #{tpu_custom_call.1} parent=1 // loop_pre_header
      _
    $region3: #{tpu_custom_call.1} parent=1 // loop_header
      %s29 = sphi 0, %s33
      %p30 = scmp.ge.s32.totalorder %s29, 4
      %s39 = sphi 0, %s41
      %s42 = sphi 0, %s39
      %s43 = sphi 0, %s42
      %s59 = sphi 0, %s43
      %s63 = sphi 0, %s63
      %s65 = sphi 0, %s63
      %s66 = sphi 0, %s65
      %s80 = sphi 0, %s66
      %s84 = sphi 0, %s84
      %s86 = sphi 0, %s84
      %s87 = sphi 0, %s86
      %s101 = sphi 0, %s87
      %s105 = sphi 0, %s105
      %s107 = sphi 0, %s105
      %s108 = sphi 0, %s107
      %s122 = sphi 0, %s108
      %s126 = sphi 0, %s126
      %s128 = sphi 0, %s126
      %s129 = sphi 0, %s128
      %s143 = sphi 0, %s129
      %s147 = sphi 0, %s147
      %s149 = sphi 0, %s147
      %s150 = sphi 0, %s149
      %s164 = sphi 0, %s150
      %s168 = sphi 0, %s168
      %s170 = sphi 0, %s168
      %s171 = sphi 0, %s170
      %s185 = sphi 0, %s171
      %s189 = sphi 0, %s189
      %s191 = sphi 0, %s189
      %s192 = sphi 0, %s191
      %s206 = sphi 0, %s192
      %s210 = sphi 0, %s210
      %s212 = sphi 0, %s210
      %s213 = sphi 0, %s212
      %s227 = sphi 0, %s213
      %s231 = sphi 0, %s231
      %s233 = sphi 0, %s231
      %s234 = sphi 0, %s233
      %s248 = sphi 0, %s234
      %s252 = sphi 0, %s252
      %s254 = sphi 0, %s252
      %s255 = sphi 0, %s254
      %s269 = sphi 0, %s255
      %s273 = sphi 0, %s273
      %s275 = sphi 0, %s273
      %s276 = sphi 0, %s275
      %s290 = sphi 0, %s276
      %s294 = sphi 0, %s294
      %s296 = sphi 0, %s294
      %s297 = sphi 0, %s296
      %s311 = sphi 0, %s297
      %s315 = sphi 0, %s315
      %s317 = sphi 0, %s315
      %s318 = sphi 0, %s317
      %s332 = sphi 0, %s318
      %s336 = sphi 0, %s336
      %s338 = sphi 0, %s336
      %s339 = sphi 0, %s338
      %s353 = sphi 0, %s339
      %s357 = sphi 0, %s357
      %s359 = sphi 0, %s357
      %s360 = sphi 0, %s359
      %s374 = sphi 0, %s360
      %s378 = sphi 0, %s378
      %s380 = sphi 0, %s378
      %s381 = sphi 0, %s380
      %s395 = sphi 0, %s381
      %s399 = sphi 0, %s399
      %s401 = sphi 0, %s399
      %s402 = sphi 0, %s401
      %s416 = sphi 0, %s402
      %s420 = sphi 0, %s420
      %s422 = sphi 0, %s420
      %s423 = sphi 0, %s422
      %s437 = sphi 0, %s423
      %s441 = sphi 0, %s441
      %s443 = sphi 0, %s441
      %s444 = sphi 0, %s443
      %s458 = sphi 0, %s444
      %s464 = sphi 0, %s466
      %s467 = sphi 0, %s464
      %s468 = sphi 0, %s467
      %s484 = sphi 0, %s468
    $region4: #{tpu_custom_call.1} parent=1 // loop_header_branch
      %32 = sbr.rel (%p30) target = $region8
    $region5: #{tpu_custom_call.1} parent=1 // loop_body
      %s34 = ssub.s32 %s29, 1
      %s35 = ssub.s32 %s29, 2
      %s36 = sadd.s32 %s29, 1
      %s37 = ssub.s32 %s29, %s36
      %p38 = scmp.eq.s32.totalorder %s37, 0
      %s40 = sadd.s32 %s39, 1
      %s41 = scalar_select %p38, %s39, %s40
      %p44 = pneg %p38
      %p45 = scmp.eq.s32.totalorder %s29, 1
      %p46 = por %p44, %p45
      %p47 = scmp.ne.s32.totalorder %s39, %s42
      %p48 = scmp.eq.s32.totalorder %s29, 0
      %p49 = por %p47, %p48
      %p50 = scmp.ne.s32.totalorder %s39, %s42
      %p51 = scmp.eq.s32.totalorder %s34, 1
      %p52 = por %p50, %p51
      %p53 = scmp.ne.s32.totalorder %s42, %s43
      %p54 = scmp.eq.s32.totalorder %s34, 0
      %p55 = por %p53, %p54
      %p56 = scmp.ne.s32.totalorder %s42, %s43
      %p57 = scmp.eq.s32.totalorder %s35, 1
      %p58 = por %p56, %p57
      %p60 = scmp.ne.s32.totalorder %s43, %s59
      %p61 = scmp.eq.s32.totalorder %s35, 0
      %p62 = por %p60, %p61
      %s64 = sadd.s32 %s63, 1
      %p67 = scmp.eq.s32.totalorder %s29, 1
      %p68 = scmp.ne.s32.totalorder %s63, %s65
      %p69 = scmp.eq.s32.totalorder %s29, 0
      %p70 = por %p68, %p69
      %p71 = scmp.ne.s32.totalorder %s63, %s65
      %p72 = scmp.eq.s32.totalorder %s34, 1
      %p73 = por %p71, %p72
      %p74 = scmp.ne.s32.totalorder %s65, %s66
      %p75 = scmp.eq.s32.totalorder %s34, 0
      %p76 = por %p74, %p75
      %p77 = scmp.ne.s32.totalorder %s65, %s66
      %p78 = scmp.eq.s32.totalorder %s35, 1
      %p79 = por %p77, %p78
      %p81 = scmp.ne.s32.totalorder %s66, %s80
      %p82 = scmp.eq.s32.totalorder %s35, 0
      %p83 = por %p81, %p82
      %s85 = sadd.s32 %s84, 1
      %p88 = scmp.eq.s32.totalorder %s29, 1
      %p89 = scmp.ne.s32.totalorder %s84, %s86
      %p90 = scmp.eq.s32.totalorder %s29, 0
      %p91 = por %p89, %p90
      %p92 = scmp.ne.s32.totalorder %s84, %s86
      %p93 = scmp.eq.s32.totalorder %s34, 1
      %p94 = por %p92, %p93
      %p95 = scmp.ne.s32.totalorder %s86, %s87
      %p96 = scmp.eq.s32.totalorder %s34, 0
      %p97 = por %p95, %p96
      %p98 = scmp.ne.s32.totalorder %s86, %s87
      %p99 = scmp.eq.s32.totalorder %s35, 1
      %p100 = por %p98, %p99
      %p102 = scmp.ne.s32.totalorder %s87, %s101
      %p103 = scmp.eq.s32.totalorder %s35, 0
      %p104 = por %p102, %p103
      %s106 = sadd.s32 %s105, 1
      %p109 = scmp.eq.s32.totalorder %s29, 1
      %p110 = scmp.ne.s32.totalorder %s105, %s107
      %p111 = scmp.eq.s32.totalorder %s29, 0
      %p112 = por %p110, %p111
      %p113 = scmp.ne.s32.totalorder %s105, %s107
      %p114 = scmp.eq.s32.totalorder %s34, 1
      %p115 = por %p113, %p114
      %p116 = scmp.ne.s32.totalorder %s107, %s108
      %p117 = scmp.eq.s32.totalorder %s34, 0
      %p118 = por %p116, %p117
      %p119 = scmp.ne.s32.totalorder %s107, %s108
      %p120 = scmp.eq.s32.totalorder %s35, 1
      %p121 = por %p119, %p120
      %p123 = scmp.ne.s32.totalorder %s108, %s122
      %p124 = scmp.eq.s32.totalorder %s35, 0
      %p125 = por %p123, %p124
      %s127 = sadd.s32 %s126, 1
      %p130 = scmp.eq.s32.totalorder %s29, 1
      %p131 = scmp.ne.s32.totalorder %s126, %s128
      %p132 = scmp.eq.s32.totalorder %s29, 0
      %p133 = por %p131, %p132
      %p134 = scmp.ne.s32.totalorder %s126, %s128
      %p135 = scmp.eq.s32.totalorder %s34, 1
      %p136 = por %p134, %p135
      %p137 = scmp.ne.s32.totalorder %s128, %s129
      %p138 = scmp.eq.s32.totalorder %s34, 0
      %p139 = por %p137, %p138
      %p140 = scmp.ne.s32.totalorder %s128, %s129
      %p141 = scmp.eq.s32.totalorder %s35, 1
      %p142 = por %p140, %p141
      %p144 = scmp.ne.s32.totalorder %s129, %s143
      %p145 = scmp.eq.s32.totalorder %s35, 0
      %p146 = por %p144, %p145
      %s148 = sadd.s32 %s147, 1
      %p151 = scmp.eq.s32.totalorder %s29, 1
      %p152 = scmp.ne.s32.totalorder %s147, %s149
      %p153 = scmp.eq.s32.totalorder %s29, 0
      %p154 = por %p152, %p153
      %p155 = scmp.ne.s32.totalorder %s147, %s149
      %p156 = scmp.eq.s32.totalorder %s34, 1
      %p157 = por %p155, %p156
      %p158 = scmp.ne.s32.totalorder %s149, %s150
      %p159 = scmp.eq.s32.totalorder %s34, 0
      %p160 = por %p158, %p159
      %p161 = scmp.ne.s32.totalorder %s149, %s150
      %p162 = scmp.eq.s32.totalorder %s35, 1
      %p163 = por %p161, %p162
      %p165 = scmp.ne.s32.totalorder %s150, %s164
      %p166 = scmp.eq.s32.totalorder %s35, 0
      %p167 = por %p165, %p166
      %s169 = sadd.s32 %s168, 1
      %p172 = scmp.eq.s32.totalorder %s29, 1
      %p173 = scmp.ne.s32.totalorder %s168, %s170
      %p174 = scmp.eq.s32.totalorder %s29, 0
      %p175 = por %p173, %p174
      %p176 = scmp.ne.s32.totalorder %s168, %s170
      %p177 = scmp.eq.s32.totalorder %s34, 1
      %p178 = por %p176, %p177
      %p179 = scmp.ne.s32.totalorder %s170, %s171
      %p180 = scmp.eq.s32.totalorder %s34, 0
      %p181 = por %p179, %p180
      %p182 = scmp.ne.s32.totalorder %s170, %s171
      %p183 = scmp.eq.s32.totalorder %s35, 1
      %p184 = por %p182, %p183
      %p186 = scmp.ne.s32.totalorder %s171, %s185
      %p187 = scmp.eq.s32.totalorder %s35, 0
      %p188 = por %p186, %p187
      %s190 = sadd.s32 %s189, 1
      %p193 = scmp.eq.s32.totalorder %s29, 1
      %p194 = scmp.ne.s32.totalorder %s189, %s191
      %p195 = scmp.eq.s32.totalorder %s29, 0
      %p196 = por %p194, %p195
      %p197 = scmp.ne.s32.totalorder %s189, %s191
      %p198 = scmp.eq.s32.totalorder %s34, 1
      %p199 = por %p197, %p198
      %p200 = scmp.ne.s32.totalorder %s191, %s192
      %p201 = scmp.eq.s32.totalorder %s34, 0
      %p202 = por %p200, %p201
      %p203 = scmp.ne.s32.totalorder %s191, %s192
      %p204 = scmp.eq.s32.totalorder %s35, 1
      %p205 = por %p203, %p204
      %p207 = scmp.ne.s32.totalorder %s192, %s206
      %p208 = scmp.eq.s32.totalorder %s35, 0
      %p209 = por %p207, %p208
      %s211 = sadd.s32 %s210, 1
      %p214 = scmp.eq.s32.totalorder %s29, 1
      %p215 = scmp.ne.s32.totalorder %s210, %s212
      %p216 = scmp.eq.s32.totalorder %s29, 0
      %p217 = por %p215, %p216
      %p218 = scmp.ne.s32.totalorder %s210, %s212
      %p219 = scmp.eq.s32.totalorder %s34, 1
      %p220 = por %p218, %p219
      %p221 = scmp.ne.s32.totalorder %s212, %s213
      %p222 = scmp.eq.s32.totalorder %s34, 0
      %p223 = por %p221, %p222
      %p224 = scmp.ne.s32.totalorder %s212, %s213
      %p225 = scmp.eq.s32.totalorder %s35, 1
      %p226 = por %p224, %p225
      %p228 = scmp.ne.s32.totalorder %s213, %s227
      %p229 = scmp.eq.s32.totalorder %s35, 0
      %p230 = por %p228, %p229
      %s232 = sadd.s32 %s231, 1
      %p235 = scmp.eq.s32.totalorder %s29, 1
      %p236 = scmp.ne.s32.totalorder %s231, %s233
      %p237 = scmp.eq.s32.totalorder %s29, 0
      %p238 = por %p236, %p237
      %p239 = scmp.ne.s32.totalorder %s231, %s233
      %p240 = scmp.eq.s32.totalorder %s34, 1
      %p241 = por %p239, %p240
      %p242 = scmp.ne.s32.totalorder %s233, %s234
      %p243 = scmp.eq.s32.totalorder %s34, 0
      %p244 = por %p242, %p243
      %p245 = scmp.ne.s32.totalorder %s233, %s234
      %p246 = scmp.eq.s32.totalorder %s35, 1
      %p247 = por %p245, %p246
      %p249 = scmp.ne.s32.totalorder %s234, %s248
      %p250 = scmp.eq.s32.totalorder %s35, 0
      %p251 = por %p249, %p250
      %s253 = sadd.s32 %s252, 1
      %p256 = scmp.eq.s32.totalorder %s29, 1
      %p257 = scmp.ne.s32.totalorder %s252, %s254
      %p258 = scmp.eq.s32.totalorder %s29, 0
      %p259 = por %p257, %p258
      %p260 = scmp.ne.s32.totalorder %s252, %s254
      %p261 = scmp.eq.s32.totalorder %s34, 1
      %p262 = por %p260, %p261
      %p263 = scmp.ne.s32.totalorder %s254, %s255
      %p264 = scmp.eq.s32.totalorder %s34, 0
      %p265 = por %p263, %p264
      %p266 = scmp.ne.s32.totalorder %s254, %s255
      %p267 = scmp.eq.s32.totalorder %s35, 1
      %p268 = por %p266, %p267
      %p270 = scmp.ne.s32.totalorder %s255, %s269
      %p271 = scmp.eq.s32.totalorder %s35, 0
      %p272 = por %p270, %p271
      %s274 = sadd.s32 %s273, 1
      %p277 = scmp.eq.s32.totalorder %s29, 1
      %p278 = scmp.ne.s32.totalorder %s273, %s275
      %p279 = scmp.eq.s32.totalorder %s29, 0
      %p280 = por %p278, %p279
      %p281 = scmp.ne.s32.totalorder %s273, %s275
      %p282 = scmp.eq.s32.totalorder %s34, 1
      %p283 = por %p281, %p282
      %p284 = scmp.ne.s32.totalorder %s275, %s276
      %p285 = scmp.eq.s32.totalorder %s34, 0
      %p286 = por %p284, %p285
      %p287 = scmp.ne.s32.totalorder %s275, %s276
      %p288 = scmp.eq.s32.totalorder %s35, 1
      %p289 = por %p287, %p288
      %p291 = scmp.ne.s32.totalorder %s276, %s290
      %p292 = scmp.eq.s32.totalorder %s35, 0
      %p293 = por %p291, %p292
      %s295 = sadd.s32 %s294, 1
      %p298 = scmp.eq.s32.totalorder %s29, 1
      %p299 = scmp.ne.s32.totalorder %s294, %s296
      %p300 = scmp.eq.s32.totalorder %s29, 0
      %p301 = por %p299, %p300
      %p302 = scmp.ne.s32.totalorder %s294, %s296
      %p303 = scmp.eq.s32.totalorder %s34, 1
      %p304 = por %p302, %p303
      %p305 = scmp.ne.s32.totalorder %s296, %s297
      %p306 = scmp.eq.s32.totalorder %s34, 0
      %p307 = por %p305, %p306
      %p308 = scmp.ne.s32.totalorder %s296, %s297
      %p309 = scmp.eq.s32.totalorder %s35, 1
      %p310 = por %p308, %p309
      %p312 = scmp.ne.s32.totalorder %s297, %s311
      %p313 = scmp.eq.s32.totalorder %s35, 0
      %p314 = por %p312, %p313
      %s316 = sadd.s32 %s315, 1
      %p319 = scmp.eq.s32.totalorder %s29, 1
      %p320 = scmp.ne.s32.totalorder %s315, %s317
      %p321 = scmp.eq.s32.totalorder %s29, 0
      %p322 = por %p320, %p321
      %p323 = scmp.ne.s32.totalorder %s315, %s317
      %p324 = scmp.eq.s32.totalorder %s34, 1
      %p325 = por %p323, %p324
      %p326 = scmp.ne.s32.totalorder %s317, %s318
      %p327 = scmp.eq.s32.totalorder %s34, 0
      %p328 = por %p326, %p327
      %p329 = scmp.ne.s32.totalorder %s317, %s318
      %p330 = scmp.eq.s32.totalorder %s35, 1
      %p331 = por %p329, %p330
      %p333 = scmp.ne.s32.totalorder %s318, %s332
      %p334 = scmp.eq.s32.totalorder %s35, 0
      %p335 = por %p333, %p334
      %s337 = sadd.s32 %s336, 1
      %p340 = scmp.eq.s32.totalorder %s29, 1
      %p341 = scmp.ne.s32.totalorder %s336, %s338
      %p342 = scmp.eq.s32.totalorder %s29, 0
      %p343 = por %p341, %p342
      %p344 = scmp.ne.s32.totalorder %s336, %s338
      %p345 = scmp.eq.s32.totalorder %s34, 1
      %p346 = por %p344, %p345
      %p347 = scmp.ne.s32.totalorder %s338, %s339
      %p348 = scmp.eq.s32.totalorder %s34, 0
      %p349 = por %p347, %p348
      %p350 = scmp.ne.s32.totalorder %s338, %s339
      %p351 = scmp.eq.s32.totalorder %s35, 1
      %p352 = por %p350, %p351
      %p354 = scmp.ne.s32.totalorder %s339, %s353
      %p355 = scmp.eq.s32.totalorder %s35, 0
      %p356 = por %p354, %p355
      %s358 = sadd.s32 %s357, 1
      %p361 = scmp.eq.s32.totalorder %s29, 1
      %p362 = scmp.ne.s32.totalorder %s357, %s359
      %p363 = scmp.eq.s32.totalorder %s29, 0
      %p364 = por %p362, %p363
      %p365 = scmp.ne.s32.totalorder %s357, %s359
      %p366 = scmp.eq.s32.totalorder %s34, 1
      %p367 = por %p365, %p366
      %p368 = scmp.ne.s32.totalorder %s359, %s360
      %p369 = scmp.eq.s32.totalorder %s34, 0
      %p370 = por %p368, %p369
      %p371 = scmp.ne.s32.totalorder %s359, %s360
      %p372 = scmp.eq.s32.totalorder %s35, 1
      %p373 = por %p371, %p372
      %p375 = scmp.ne.s32.totalorder %s360, %s374
      %p376 = scmp.eq.s32.totalorder %s35, 0
      %p377 = por %p375, %p376
      %s379 = sadd.s32 %s378, 1
      %p382 = scmp.eq.s32.totalorder %s29, 1
      %p383 = scmp.ne.s32.totalorder %s378, %s380
      %p384 = scmp.eq.s32.totalorder %s29, 0
      %p385 = por %p383, %p384
      %p386 = scmp.ne.s32.totalorder %s378, %s380
      %p387 = scmp.eq.s32.totalorder %s34, 1
      %p388 = por %p386, %p387
      %p389 = scmp.ne.s32.totalorder %s380, %s381
      %p390 = scmp.eq.s32.totalorder %s34, 0
      %p391 = por %p389, %p390
      %p392 = scmp.ne.s32.totalorder %s380, %s381
      %p393 = scmp.eq.s32.totalorder %s35, 1
      %p394 = por %p392, %p393
      %p396 = scmp.ne.s32.totalorder %s381, %s395
      %p397 = scmp.eq.s32.totalorder %s35, 0
      %p398 = por %p396, %p397
      %s400 = sadd.s32 %s399, 1
      %p403 = scmp.eq.s32.totalorder %s29, 1
      %p404 = scmp.ne.s32.totalorder %s399, %s401
      %p405 = scmp.eq.s32.totalorder %s29, 0
      %p406 = por %p404, %p405
      %p407 = scmp.ne.s32.totalorder %s399, %s401
      %p408 = scmp.eq.s32.totalorder %s34, 1
      %p409 = por %p407, %p408
      %p410 = scmp.ne.s32.totalorder %s401, %s402
      %p411 = scmp.eq.s32.totalorder %s34, 0
      %p412 = por %p410, %p411
      %p413 = scmp.ne.s32.totalorder %s401, %s402
      %p414 = scmp.eq.s32.totalorder %s35, 1
      %p415 = por %p413, %p414
      %p417 = scmp.ne.s32.totalorder %s402, %s416
      %p418 = scmp.eq.s32.totalorder %s35, 0
      %p419 = por %p417, %p418
      %s421 = sadd.s32 %s420, 1
      %p424 = scmp.eq.s32.totalorder %s29, 1
      %p425 = scmp.ne.s32.totalorder %s420, %s422
      %p426 = scmp.eq.s32.totalorder %s29, 0
      %p427 = por %p425, %p426
      %p428 = scmp.ne.s32.totalorder %s420, %s422
      %p429 = scmp.eq.s32.totalorder %s34, 1
      %p430 = por %p428, %p429
      %p431 = scmp.ne.s32.totalorder %s422, %s423
      %p432 = scmp.eq.s32.totalorder %s34, 0
      %p433 = por %p431, %p432
      %p434 = scmp.ne.s32.totalorder %s422, %s423
      %p435 = scmp.eq.s32.totalorder %s35, 1
      %p436 = por %p434, %p435
      %p438 = scmp.ne.s32.totalorder %s423, %s437
      %p439 = scmp.eq.s32.totalorder %s35, 0
      %p440 = por %p438, %p439
      %s442 = sadd.s32 %s441, 1
      %p445 = scmp.eq.s32.totalorder %s29, 1
      %p446 = scmp.ne.s32.totalorder %s441, %s443
      %p447 = scmp.eq.s32.totalorder %s29, 0
      %p448 = por %p446, %p447
      %p449 = scmp.ne.s32.totalorder %s441, %s443
      %p450 = scmp.eq.s32.totalorder %s34, 1
      %p451 = por %p449, %p450
      %p452 = scmp.ne.s32.totalorder %s443, %s444
      %p453 = scmp.eq.s32.totalorder %s34, 0
      %p454 = por %p452, %p453
      %p455 = scmp.ne.s32.totalorder %s443, %s444
      %p456 = scmp.eq.s32.totalorder %s35, 1
      %p457 = por %p455, %p456
      %p459 = scmp.ne.s32.totalorder %s444, %s458
      %p460 = scmp.eq.s32.totalorder %s35, 0
      %p461 = por %p459, %p460
      %s462 = ssub.s32 %s29, %s36
      %p463 = scmp.eq.s32.totalorder %s462, 0
      %s465 = sadd.s32 %s464, 1
      %s466 = scalar_select %p463, %s464, %s465
      %p469 = pneg %p463
      %p470 = scmp.eq.s32.totalorder %s29, 1
      %p471 = por %p469, %p470
      %p472 = scmp.ne.s32.totalorder %s464, %s467
      %p473 = scmp.eq.s32.totalorder %s29, 0
      %p474 = por %p472, %p473
      %p475 = scmp.ne.s32.totalorder %s464, %s467
      %p476 = scmp.eq.s32.totalorder %s34, 1
      %p477 = por %p475, %p476
      %p478 = scmp.ne.s32.totalorder %s467, %s468
      %p479 = scmp.eq.s32.totalorder %s34, 0
      %p480 = por %p478, %p479
      %p481 = scmp.ne.s32.totalorder %s467, %s468
      %p482 = scmp.eq.s32.totalorder %s35, 1
      %p483 = por %p481, %p482
      %p485 = scmp.ne.s32.totalorder %s468, %s484
      %p486 = scmp.eq.s32.totalorder %s35, 0
      %p487 = por %p485, %p486
      %p488 = scmp.le.s32.totalorder 1, %s29
      %p489 = scmp.lt.s32.totalorder %s29, 3
      %p490 = pnand %p488, %p489
      %p491 = pneg %p490
      // Predicated region
      $region9: #{tpu_custom_call.1} parent=5 // pred_check
        _
      $region10: #{tpu_custom_call.1} parent=5 // pred_check_branch
        %493 = sbr.rel (%p490) target = $region12
      $region11: #{tpu_custom_call.1} parent=5 // pred_region
        %s494 = ssub.s32 %s29, 1
        // Predicated region
        $region13: #{tpu_custom_call.1} parent=11 // pred_check
          %p495 = pneg %p76
        $region14: #{tpu_custom_call.1} parent=11 // pred_check_branch
          %497 = sbr.rel (%p495) target = $region16
        $region15: #{tpu_custom_call.1} parent=11 // pred_region
          _
        $region16: #{tpu_custom_call.1} parent=11 // pred_fallthru
          _
        // Predicated region
        $region17: #{tpu_custom_call.1} parent=11 // pred_check
          %p498 = pneg %p97
        $region18: #{tpu_custom_call.1} parent=11 // pred_check_branch
          %500 = sbr.rel (%p498) target = $region20
        $region19: #{tpu_custom_call.1} parent=11 // pred_region
          _
        $region20: #{tpu_custom_call.1} parent=11 // pred_fallthru
          _
        // Predicated region
        $region21: #{tpu_custom_call.1} parent=11 // pred_check
          %p501 = pneg %p118
        $region22: #{tpu_custom_call.1} parent=11 // pred_check_branch
          %503 = sbr.rel (%p501) target = $region24
        $region23: #{tpu_custom_call.1} parent=11 // pred_region
          _
        $region24: #{tpu_custom_call.1} parent=11 // pred_fallthru
          _
        // Predicated region
        $region25: #{tpu_custom_call.1} parent=11 // pred_check
          %p504 = pneg %p139
        $region26: #{tpu_custom_call.1} parent=11 // pred_check_branch
          %506 = sbr.rel (%p504) target = $region28
        $region27: #{tpu_custom_call.1} parent=11 // pred_region
          _
        $region28: #{tpu_custom_call.1} parent=11 // pred_fallthru
          _
        // Predicated region
        $region29: #{tpu_custom_call.1} parent=11 // pred_check
          %p507 = pneg %p160
        $region30: #{tpu_custom_call.1} parent=11 // pred_check_branch
          %509 = sbr.rel (%p507) target = $region32
        $region31: #{tpu_custom_call.1} parent=11 // pred_region
          _
        $region32: #{tpu_custom_call.1} parent=11 // pred_fallthru
          _
        // Predicated region
        $region33: #{tpu_custom_call.1} parent=11 // pred_check
          %p510 = pneg %p181
        $region34: #{tpu_custom_call.1} parent=11 // pred_check_branch
          %512 = sbr.rel (%p510) target = $region36
        $region35: #{tpu_custom_call.1} parent=11 // pred_region
          _
        $region36: #{tpu_custom_call.1} parent=11 // pred_fallthru
          _
        // Predicated region
        $region37: #{tpu_custom_call.1} parent=11 // pred_check
          %p513 = pneg %p202
        $region38: #{tpu_custom_call.1} parent=11 // pred_check_branch
          %515 = sbr.rel (%p513) target = $region40
        $region39: #{tpu_custom_call.1} parent=11 // pred_region
          _
        $region40: #{tpu_custom_call.1} parent=11 // pred_fallthru
          _
        // Predicated region
        $region41: #{tpu_custom_call.1} parent=11 // pred_check
          %p516 = pneg %p223
        $region42: #{tpu_custom_call.1} parent=11 // pred_check_branch
          %518 = sbr.rel (%p516) target = $region44
        $region43: #{tpu_custom_call.1} parent=11 // pred_region
          _
        $region44: #{tpu_custom_call.1} parent=11 // pred_fallthru
          _
        // Predicated region
        $region45: #{tpu_custom_call.1} parent=11 // pred_check
          %p519 = pneg %p244
        $region46: #{tpu_custom_call.1} parent=11 // pred_check_branch
          %521 = sbr.rel (%p519) target = $region48
        $region47: #{tpu_custom_call.1} parent=11 // pred_region
          _
        $region48: #{tpu_custom_call.1} parent=11 // pred_fallthru
          _
        // Predicated region
        $region49: #{tpu_custom_call.1} parent=11 // pred_check
          %p522 = pneg %p265
        $region50: #{tpu_custom_call.1} parent=11 // pred_check_branch
          %524 = sbr.rel (%p522) target = $region52
        $region51: #{tpu_custom_call.1} parent=11 // pred_region
          _
        $region52: #{tpu_custom_call.1} parent=11 // pred_fallthru
          _
        // Predicated region
        $region53: #{tpu_custom_call.1} parent=11 // pred_check
          %p525 = pneg %p286
        $region54: #{tpu_custom_call.1} parent=11 // pred_check_branch
          %527 = sbr.rel (%p525) target = $region56
        $region55: #{tpu_custom_call.1} parent=11 // pred_region
          _
        $region56: #{tpu_custom_call.1} parent=11 // pred_fallthru
          _
        // Predicated region
        $region57: #{tpu_custom_call.1} parent=11 // pred_check
          %p528 = pneg %p307
        $region58: #{tpu_custom_call.1} parent=11 // pred_check_branch
          %530 = sbr.rel (%p528) target = $region60
        $region59: #{tpu_custom_call.1} parent=11 // pred_region
          _
        $region60: #{tpu_custom_call.1} parent=11 // pred_fallthru
          _
        // Predicated region
        $region61: #{tpu_custom_call.1} parent=11 // pred_check
          %p531 = pneg %p328
        $region62: #{tpu_custom_call.1} parent=11 // pred_check_branch
          %533 = sbr.rel (%p531) target = $region64
        $region63: #{tpu_custom_call.1} parent=11 // pred_region
          _
        $region64: #{tpu_custom_call.1} parent=11 // pred_fallthru
          _
        // Predicated region
        $region65: #{tpu_custom_call.1} parent=11 // pred_check
          %p534 = pneg %p349
        $region66: #{tpu_custom_call.1} parent=11 // pred_check_branch
          %536 = sbr.rel (%p534) target = $region68
        $region67: #{tpu_custom_call.1} parent=11 // pred_region
          _
        $region68: #{tpu_custom_call.1} parent=11 // pred_fallthru
          _
        // Predicated region
        $region69: #{tpu_custom_call.1} parent=11 // pred_check
          %p537 = pneg %p370
        $region70: #{tpu_custom_call.1} parent=11 // pred_check_branch
          %539 = sbr.rel (%p537) target = $region72
        $region71: #{tpu_custom_call.1} parent=11 // pred_region
          _
        $region72: #{tpu_custom_call.1} parent=11 // pred_fallthru
          _
        // Predicated region
        $region73: #{tpu_custom_call.1} parent=11 // pred_check
          %p540 = pneg %p391
        $region74: #{tpu_custom_call.1} parent=11 // pred_check_branch
          %542 = sbr.rel (%p540) target = $region76
        $region75: #{tpu_custom_call.1} parent=11 // pred_region
          _
        $region76: #{tpu_custom_call.1} parent=11 // pred_fallthru
          _
        // Predicated region
        $region77: #{tpu_custom_call.1} parent=11 // pred_check
          %p543 = pneg %p412
        $region78: #{tpu_custom_call.1} parent=11 // pred_check_branch
          %545 = sbr.rel (%p543) target = $region80
        $region79: #{tpu_custom_call.1} parent=11 // pred_region
          _
        $region80: #{tpu_custom_call.1} parent=11 // pred_fallthru
          _
        // Predicated region
        $region81: #{tpu_custom_call.1} parent=11 // pred_check
          %p546 = pneg %p433
        $region82: #{tpu_custom_call.1} parent=11 // pred_check_branch
          %548 = sbr.rel (%p546) target = $region84
        $region83: #{tpu_custom_call.1} parent=11 // pred_region
          _
        $region84: #{tpu_custom_call.1} parent=11 // pred_fallthru
          _
        // Predicated region
        $region85: #{tpu_custom_call.1} parent=11 // pred_check
          %p549 = pneg %p454
        $region86: #{tpu_custom_call.1} parent=11 // pred_check_branch
          %551 = sbr.rel (%p549) target = $region88
        $region87: #{tpu_custom_call.1} parent=11 // pred_region
          _
        $region88: #{tpu_custom_call.1} parent=11 // pred_fallthru
          _
      $region12: #{tpu_custom_call.1} parent=5 // pred_fallthru
        _
      %p552 = scmp.lt.s32.totalorder %s29, 2
      // Predicated region
      $region89: #{tpu_custom_call.1} parent=5 // pred_check
        %p553 = pneg %p552
      $region90: #{tpu_custom_call.1} parent=5 // pred_check_branch
        %555 = sbr.rel (%p553) target = $region92
      $region91: #{tpu_custom_call.1} parent=5 // pred_region
        // Predicated region
        $region93: #{tpu_custom_call.1} parent=91 // pred_check
          %p556 = pneg %p49
        $region94: #{tpu_custom_call.1} parent=91 // pred_check_branch
          %558 = sbr.rel (%p556) target = $region96
        $region95: #{tpu_custom_call.1} parent=91 // pred_region
          %p559 = scmp.lt.s32.totalorder %s29, 1
          %s560 = scalar_select %p559, %s29, 1
          %s561 = smul.addr %s560, 2
          %s562 = smul.addr %s561, 8
          %s563 = scalar_lea.vmem %s0, %s562
        $region96: #{tpu_custom_call.1} parent=91 // pred_fallthru
          _
      $region92: #{tpu_custom_call.1} parent=5 // pred_fallthru
        _
      %p564 = scmp.le.s32.totalorder 1, %s29
      %p565 = scmp.lt.s32.totalorder %s29, 3
      %p566 = pnand %p564, %p565
      %p567 = pneg %p566
      // Predicated region
      $region97: #{tpu_custom_call.1} parent=5 // pred_check
        _
      $region98: #{tpu_custom_call.1} parent=5 // pred_check_branch
        %569 = sbr.rel (%p566) target = $region100
      $region99: #{tpu_custom_call.1} parent=5 // pred_region
        %s570 = ssub.s32 %s29, 1
        %p571 = scmp.lt.s32.totalorder %s34, 1
        %s572 = scalar_select %p571, %s34, 1
        %s573 = smul.addr %s572, 2
        %s574 = smul.addr %s573, 8
        %s575 = scalar_lea.vmem %s0, %s574
        %p576 = pneg %p55
        %p577 = pneg %p52
        %p578 = pneg %p76
        %p579 = pneg %p73
        %p580 = pneg %p97
        %p581 = pneg %p94
        %p582 = pneg %p118
        %p583 = pneg %p115
        %p584 = pneg %p139
        %p585 = pneg %p136
        %p586 = pneg %p160
        %p587 = pneg %p157
        %p588 = pneg %p181
        %p589 = pneg %p178
        %p590 = pneg %p202
        %p591 = pneg %p199
        %p592 = pneg %p223
        %p593 = pneg %p220
        %p594 = pneg %p244
        %p595 = pneg %p241
        %p596 = pneg %p265
        %p597 = pneg %p262
        %p598 = pneg %p286
        %p599 = pneg %p283
        %p600 = pneg %p307
        %p601 = pneg %p304
        %p602 = pneg %p328
        %p603 = pneg %p325
        %p604 = pneg %p349
        %p605 = pneg %p346
        %p606 = pneg %p370
        %p607 = pneg %p367
        %p608 = pneg %p391
        %p609 = pneg %p388
        %p610 = pneg %p412
        %p611 = pneg %p409
        %p612 = pneg %p433
        %p613 = pneg %p430
        %p614 = pneg %p454
        %p615 = pneg %p451
        %p616 = pneg %p480
        %p617 = pneg %p477
        %s618 = sand.u32 %s467, 1
        %s619 = scalar_lea.sflag [#allocation4], %s618
        %s620 = sand.u32 %s467, 1
        %s621 = smul.addr %s620, 8
        %s622 = scalar_lea.vmem [#allocation3], %s621
        %p623 = scmp.lt.s32.totalorder %s34, 1
        %s624 = scalar_select %p623, %s34, 1
        %s625 = smul.addr %s624, 2
        %s626 = smul.addr %s625, 8
        %s627 = scalar_lea.vmem %s0, %s626
        %v628 = vld [vmem:[%s627] sm:$0xff]
        %v629 = vld [vmem:[%s627 + $0x8] sm:$0xff]
        %v630 = vld [vmem:[%s1] sm:$0xff]
        %v631 = vld [vmem:[%s2] sm:$0x1]
        %v633 = vperm.slane %v631, 0
        %vm635 = vcmask 64512
        %v637 = vsel %vm635, %v628, 0
        %v640 = vsel %vm635, %v629, 0
        %642 = vmatpush.msra.mxu0 0.0
        %643 = vmatpush.msra.mxu0 0.0
        %644 = vmatpush.msra.mxu0 0.0
        %645 = vmatpush.msra.mxu0 0.0
        %646 = vmatpush.msra.mxu0 0.0
        %647 = vmatpush.msra.mxu0 0.0
        %648 = vmatpush.msra.mxu0 0.0
        %649 = vmatpush.msra.mxu0 0.0
        %650 = vmatpush.msra.mxu0 0.0
        %651 = vmatpush.msra.mxu0 0.0
        %652 = vmatpush.msra.mxu0 0.0
        %653 = vmatpush.msra.mxu0 0.0
        %654 = vmatpush.msra.mxu0 0.0
        %655 = vmatpush.msra.mxu0 0.0
        %656 = vmatpush.msra.mxu0 0.0
        %657 = vmatpush.msra.mxu0 %v630
        %658 = vmatmul.f32.gmra.mxu0 %v637
        %v659 = vpop.f32.mrf.mxu0
        %v660 = vadd.f32 %v633, %v659
        %661 = vmatmul.f32.gmra.mxu0 %v640
        %v662 = vpop.f32.mrf.mxu0
        %v663 = vadd.f32 %v633, %v662
        %664 = vdwg.mxu0
        %v665 = vld [vmem:[%s3] sm:$0xff]
        %v666 = vld [vmem:[%s3 + $0x8] sm:$0xff]
        %v667 = vadd.f32 %v660, %v665
        %v668 = vadd.f32 %v663, %v666
        %v669 = vlaneseq
        %v670 = vshrl.u32 %v669, 7
        %v671 = vadd.s32 %v670, 8
        %v672 = vlaneseq
        %v673 = vand.u32 %v672, 127
        %vm674 = vcmp.le.s32.totalorder %v673, %v670
        %vm675 = vcmp.le.s32.totalorder %v673, %v671
        %v676 = vsel %vm674, 0.0, -1e+30
        %v677 = vsel %vm675, 0.0, -1e+30
        %v678 = vld [vmem:[%s4] sm:$0x1]
        %v679 = vld [vmem:[%s5] sm:$0x1]
        %v680 = vld [vmem:[%s6] sm:$0xff]
        %v681 = vld [vmem:[%s6 + $0x8] sm:$0xff]
        %v682 = vld [vmem:[%s6 + $0x10] sm:$0xff]
        %v683 = vld [vmem:[%s6 + $0x18] sm:$0xff]
        %v684 = vld [vmem:[%s7] sm:$0x1]
        %v685 = vld [vmem:[%s8] sm:$0xff]
        %v686 = vld [vmem:[%s8 + $0x8] sm:$0xff]
        %v687 = vld [vmem:[%s8 + $0x10] sm:$0xff]
        %v688 = vld [vmem:[%s8 + $0x18] sm:$0xff]
        %v689 = vld [vmem:[%s9] sm:$0x1]
        %v690 = vld [vmem:[%s10] sm:$0x1]
        %v691 = vld [vmem:[%s11] sm:$0x1]
        %v692 = vld [vmem:[%s12] sm:$0xff]
        %v693 = vld [vmem:[%s12 + $0x8] sm:$0xff]
        %v694 = vld [vmem:[%s12 + $0x10] sm:$0xff]
        %v695 = vld [vmem:[%s12 + $0x18] sm:$0xff]
        %v696 = vld [vmem:[%s13] sm:$0x1]
        %v697 = vld [vmem:[%s14] sm:$0xff]
        %v698 = vld [vmem:[%s14 + $0x8] sm:$0xff]
        %v699 = vld [vmem:[%s14 + $0x10] sm:$0xff]
        %v700 = vld [vmem:[%s14 + $0x18] sm:$0xff]
        %v701 = vld [vmem:[%s14 + $0x20] sm:$0xff]
        %v702 = vld [vmem:[%s14 + $0x28] sm:$0xff]
        %v703 = vld [vmem:[%s14 + $0x30] sm:$0xff]
        %v704 = vld [vmem:[%s14 + $0x38] sm:$0xff]
        %v705 = vld [vmem:[%s14 + $0x40] sm:$0xff]
        %v706 = vld [vmem:[%s14 + $0x48] sm:$0xff]
        %v707 = vld [vmem:[%s14 + $0x50] sm:$0xff]
        %v708 = vld [vmem:[%s14 + $0x58] sm:$0xff]
        %v709 = vld [vmem:[%s14 + $0x60] sm:$0xff]
        %v710 = vld [vmem:[%s14 + $0x68] sm:$0xff]
        %v711 = vld [vmem:[%s14 + $0x70] sm:$0xff]
        %v712 = vld [vmem:[%s14 + $0x78] sm:$0xff]
        %v713 = vld [vmem:[%s15] sm:$0x1]
        %vm714 = vcmask 261120
        %v715 = vsel %vm714, %v667, 0.0
        %716 = vadd.xlane.f32.xlu0 %v715
        %v717 = vpop.xlane.xlu0 %716
        %v718 = vsel %vm714, %v668, 0.0
        %719 = vadd.xlane.f32.xlu0 %v718
        %v720 = vpop.xlane.xlu0 %719
        %v721 = vrcp.pop 32.0
        %v722 = vmul.f32 32.0, %v721
        %v723 = vsub.f32 1.0, %v722
        %v724 = vmul.f32 %v721, %v723
        %v725 = vadd.f32 %v721, %v724
        %vm726 = vweird.f32 %v721
        %v727 = vsel %vm726, %v721, %v725
        %v728 = vmul.f32 %v717, %v727
        %v729 = vmul.f32 %v720, %v727
        %v730 = vsub.f32 %v667, %v728
        %v731 = vsub.f32 %v668, %v729
        %v732 = vmul.f32 %v730, %v730
        %v733 = vmul.f32 %v731, %v731
        %v734 = vsel %vm714, %v732, 0.0
        %735 = vadd.xlane.f32.xlu0 %v734
        %v736 = vpop.xlane.xlu0 %735
        %v737 = vsel %vm714, %v733, 0.0
        %738 = vadd.xlane.f32.xlu0 %v737
        %v739 = vpop.xlane.xlu0 %738
        %v740 = vmul.f32 %v736, %v727
        %v741 = vmul.f32 %v739, %v727
        %v742 = vadd.f32 %v740, 1e-05
        %v743 = vadd.f32 %v741, 1e-05
        %v744 = vrsqrt.pop %v742
        %v745 = vmul.f32 %v744, %v742
        %v746 = vmul.f32 %v745, %v744
        %v747 = vmul.f32 0.5, %v746
        %v748 = vsub.f32 1.5, %v747
        %v749 = vmul.f32 %v744, %v748
        %vm750 = vweird.f32 %v742
        %vm751 = vweird.f32 %v744
        %vm752 = vmor %vm750, %vm751
        %v753 = vsel %vm752, %v744, %v749
        %v754 = vrsqrt.pop %v743
        %v755 = vmul.f32 %v754, %v743
        %v756 = vmul.f32 %v755, %v754
        %v757 = vmul.f32 0.5, %v756
        %v758 = vsub.f32 1.5, %v757
        %v759 = vmul.f32 %v754, %v758
        %vm760 = vweird.f32 %v743
        %vm761 = vweird.f32 %v754
        %vm762 = vmor %vm760, %vm761
        %v763 = vsel %vm762, %v754, %v759
        %v764 = vmul.f32 %v730, %v753
        %v765 = vmul.f32 %v731, %v763
        %v767 = vperm.slane %v678, 0
        %v769 = vmul.f32 %v764, %v767
        %v770 = vmul.f32 %v765, %v767
        %v772 = vperm.slane %v679, 0
        %v774 = vadd.f32 %v769, %v772
        %v775 = vadd.f32 %v770, %v772
        %v777 = vperm.slane %v684, 0
        %v780 = vsel %vm714, %v774, 0
        %v783 = vsel %vm714, %v775, 0
        %785 = vmatpush.msra.mxu0 0.0
        %786 = vmatpush.msra.mxu0 0.0
        %787 = vmatpush.msra.mxu0 0.0
        %788 = vmatpush.msra.mxu0 0.0
        %789 = vmatpush.msra.mxu0 0.0
        %790 = vmatpush.msra.mxu0 0.0
        %791 = vmatpush.msra.mxu0 0.0
        %792 = vmatpush.msra.mxu0 0.0
        %793 = vmatpush.msra.mxu0 0.0
        %794 = vmatpush.msra.mxu0 0.0
        %795 = vmatpush.msra.mxu0 0.0
        %796 = vmatpush.msra.mxu0 0.0
        %797 = vmatpush.msra.mxu0 %v683
        %798 = vmatpush.msra.mxu0 %v682
        %799 = vmatpush.msra.mxu0 %v681
        %800 = vmatpush.msra.mxu0 %v680
        %801 = vmatmul.f32.gmra.mxu0 %v780
        %v802 = vpop.f32.mrf.mxu0
        %v803 = vadd.f32 %v777, %v802
        %804 = vmatmul.f32.gmra.mxu0 %v783
        %v805 = vpop.f32.mrf.mxu0
        %v806 = vadd.f32 %v777, %v805
        %807 = vdwg.mxu0
        %v808 = vmul.f32 %v803, 0.25
        %v809 = vmul.f32 %v806, 0.25
        %812 = vrot.lane.b32.xlu0 %v803, 96
        %v813 = vpop.permute.xlu0 %812
        %814 = vrot.lane.b32.xlu0 %v806, 96
        %v815 = vpop.permute.xlu0 %814
        %vm816 = vcmask 130048
        %v818 = vsel %vm816, %v808, 0
        %v821 = vsel %vm816, %v809, 0
        %v823 = vsel %vm816, %v813, 0
        %v825 = vsel %vm816, %v815, 0
        %827 = vmatpush.xpose.msra.mxu0 0.0
        %828 = vmatpush.xpose.msra.mxu0 0.0
        %829 = vmatpush.xpose.msra.mxu0 0.0
        %830 = vmatpush.xpose.msra.mxu0 0.0
        %831 = vmatpush.xpose.msra.mxu0 0.0
        %832 = vmatpush.xpose.msra.mxu0 0.0
        %833 = vmatpush.xpose.msra.mxu0 0.0
        %834 = vmatpush.xpose.msra.mxu0 0.0
        %835 = vmatpush.xpose.msra.mxu0 0.0
        %836 = vmatpush.xpose.msra.mxu0 0.0
        %837 = vmatpush.xpose.msra.mxu0 0.0
        %838 = vmatpush.xpose.msra.mxu0 0.0
        %839 = vmatpush.xpose.msra.mxu0 0.0
        %840 = vmatpush.xpose.msra.mxu0 0.0
        %841 = vmatpush.xpose.msra.mxu0 %v825
        %842 = vmatpush.xpose.msra.mxu0 %v823
        %843 = vmatmul.f32.gmra.mxu0 %v818
        %v844 = vpop.f32.mrf.mxu0
        %v845 = vadd.f32 %v676, %v844
        %846 = vmatmul.f32.gmra.mxu0 %v821
        %v847 = vpop.f32.mrf.mxu0
        %v848 = vadd.f32 %v677, %v847
        %849 = vdwg.mxu0
        %v850 = vsel %vm816, %v845, -inf
        %851 = vmax.xlane.f32.xlu0 %v850
        %v852 = vpop.xlane.xlu0 %851
        %v853 = vsel %vm816, %v848, -inf
        %854 = vmax.xlane.f32.xlu0 %v853
        %v855 = vpop.xlane.xlu0 %854
        %v856 = vsub.f32 %v845, %v852
        %v857 = vsub.f32 %v848, %v855
        %v858 = vmul.f32 %v856, 1.442695
        %v859 = vpow.pop %v858
        %v860 = vmul.f32 %v857, 1.442695
        %v861 = vpow.pop %v860
        %v862 = vsel %vm816, %v859, 0.0
        %863 = vadd.xlane.f32.xlu0 %v862
        %v864 = vpop.xlane.xlu0 %863
        %v865 = vsel %vm816, %v861, 0.0
        %866 = vadd.xlane.f32.xlu0 %v865
        %v867 = vpop.xlane.xlu0 %866
        %v868 = vrcp.pop %v864
        %v869 = vrcp.pop %v867
        %v870 = vmul.f32 %v859, %v868
        %v871 = vmul.f32 %v861, %v869
        %872 = vrot.lane.b32.xlu0 %v803, 64
        %v873 = vpop.permute.xlu0 %872
        %874 = vrot.lane.b32.xlu0 %v806, 64
        %v875 = vpop.permute.xlu0 %874
        %v879 = vsel %vm816, %v870, 0
        %v882 = vsel %vm816, %v871, 0
        %884 = vmatpush.msra.mxu0 0.0
        %885 = vmatpush.msra.mxu0 0.0
        %886 = vmatpush.msra.mxu0 0.0
        %887 = vmatpush.msra.mxu0 0.0
        %888 = vmatpush.msra.mxu0 0.0
        %889 = vmatpush.msra.mxu0 0.0
        %890 = vmatpush.msra.mxu0 0.0
        %891 = vmatpush.msra.mxu0 0.0
        %892 = vmatpush.msra.mxu0 0.0
        %893 = vmatpush.msra.mxu0 0.0
        %894 = vmatpush.msra.mxu0 0.0
        %895 = vmatpush.msra.mxu0 0.0
        %896 = vmatpush.msra.mxu0 0.0
        %897 = vmatpush.msra.mxu0 0.0
        %898 = vmatpush.msra.mxu0 %v875
        %899 = vmatpush.msra.mxu0 %v873
        %900 = vmatmul.f32.gmra.mxu0 %v879
        %v901 = vpop.f32.mrf.mxu0
        %v902 = vadd.f32 0.0, %v901
        %903 = vmatmul.f32.gmra.mxu0 %v882
        %v904 = vpop.f32.mrf.mxu0
        %v905 = vadd.f32 0.0, %v904
        %906 = vdwg.mxu0
        %v908 = vsel %vm816, %v902, 0
        %v911 = vsel %vm816, %v905, 0
        %913 = vmatpush.msra.mxu0 0.0
        %914 = vmatpush.msra.mxu0 0.0
        %915 = vmatpush.msra.mxu0 0.0
        %916 = vmatpush.msra.mxu0 0.0
        %917 = vmatpush.msra.mxu0 0.0
        %918 = vmatpush.msra.mxu0 0.0
        %919 = vmatpush.msra.mxu0 0.0
        %920 = vmatpush.msra.mxu0 0.0
        %921 = vmatpush.msra.mxu0 0.0
        %922 = vmatpush.msra.mxu0 0.0
        %923 = vmatpush.msra.mxu0 0.0
        %924 = vmatpush.msra.mxu0 0.0
        %925 = vmatpush.msra.mxu0 0.0
        %926 = vmatpush.msra.mxu0 0.0
        %927 = vmatpush.msra.mxu0 %v686
        %928 = vmatpush.msra.mxu0 %v685
        %929 = vmatmul.f32.gmra.mxu0 %v908
        %v930 = vpop.f32.mrf.mxu0
        %v931 = vadd.f32 0.0, %v930
        %932 = vmatmul.f32.gmra.mxu0 %v911
        %v933 = vpop.f32.mrf.mxu0
        %v934 = vadd.f32 0.0, %v933
        %935 = vdwg.mxu0
        %v937 = vperm.slane %v689, 0
        %v939 = vadd.f32 %v937, %v931
        %v940 = vadd.f32 %v937, %v934
        %941 = vrot.lane.b32.xlu0 %v808, 112
        %v942 = vpop.permute.xlu0 %941
        %943 = vrot.lane.b32.xlu0 %v809, 112
        %v944 = vpop.permute.xlu0 %943
        %945 = vrot.lane.b32.xlu0 %v803, 80
        %v946 = vpop.permute.xlu0 %945
        %947 = vrot.lane.b32.xlu0 %v806, 80
        %v948 = vpop.permute.xlu0 %947
        %v949 = vsel %vm816, %v942, 0
        %v951 = vsel %vm816, %v944, 0
        %v953 = vsel %vm816, %v946, 0
        %v955 = vsel %vm816, %v948, 0
        %957 = vmatpush.xpose.msra.mxu0 0.0
        %958 = vmatpush.xpose.msra.mxu0 0.0
        %959 = vmatpush.xpose.msra.mxu0 0.0
        %960 = vmatpush.xpose.msra.mxu0 0.0
        %961 = vmatpush.xpose.msra.mxu0 0.0
        %962 = vmatpush.xpose.msra.mxu0 0.0
        %963 = vmatpush.xpose.msra.mxu0 0.0
        %964 = vmatpush.xpose.msra.mxu0 0.0
        %965 = vmatpush.xpose.msra.mxu0 0.0
        %966 = vmatpush.xpose.msra.mxu0 0.0
        %967 = vmatpush.xpose.msra.mxu0 0.0
        %968 = vmatpush.xpose.msra.mxu0 0.0
        %969 = vmatpush.xpose.msra.mxu0 0.0
        %970 = vmatpush.xpose.msra.mxu0 0.0
        %971 = vmatpush.xpose.msra.mxu0 %v955
        %972 = vmatpush.xpose.msra.mxu0 %v953
        %973 = vmatmul.f32.gmra.mxu0 %v949
        %v974 = vpop.f32.mrf.mxu0
        %v975 = vadd.f32 %v676, %v974
        %976 = vmatmul.f32.gmra.mxu0 %v951
        %v977 = vpop.f32.mrf.mxu0
        %v978 = vadd.f32 %v677, %v977
        %979 = vdwg.mxu0
        %v980 = vsel %vm816, %v975, -inf
        %981 = vmax.xlane.f32.xlu0 %v980
        %v982 = vpop.xlane.xlu0 %981
        %v983 = vsel %vm816, %v978, -inf
        %984 = vmax.xlane.f32.xlu0 %v983
        %v985 = vpop.xlane.xlu0 %984
        %v986 = vsub.f32 %v975, %v982
        %v987 = vsub.f32 %v978, %v985
        %v988 = vmul.f32 %v986, 1.442695
        %v989 = vpow.pop %v988
        %v990 = vmul.f32 %v987, 1.442695
        %v991 = vpow.pop %v990
        %v992 = vsel %vm816, %v989, 0.0
        %993 = vadd.xlane.f32.xlu0 %v992
        %v994 = vpop.xlane.xlu0 %993
        %v995 = vsel %vm816, %v991, 0.0
        %996 = vadd.xlane.f32.xlu0 %v995
        %v997 = vpop.xlane.xlu0 %996
        %v998 = vrcp.pop %v994
        %v999 = vrcp.pop %v997
        %v1000 = vmul.f32 %v989, %v998
        %v1001 = vmul.f32 %v991, %v999
        %1002 = vrot.lane.b32.xlu0 %v803, 48
        %v1003 = vpop.permute.xlu0 %1002
        %1004 = vrot.lane.b32.xlu0 %v806, 48
        %v1005 = vpop.permute.xlu0 %1004
        %v1009 = vsel %vm816, %v1000, 0
        %v1012 = vsel %vm816, %v1001, 0
        %1014 = vmatpush.msra.mxu0 0.0
        %1015 = vmatpush.msra.mxu0 0.0
        %1016 = vmatpush.msra.mxu0 0.0
        %1017 = vmatpush.msra.mxu0 0.0
        %1018 = vmatpush.msra.mxu0 0.0
        %1019 = vmatpush.msra.mxu0 0.0
        %1020 = vmatpush.msra.mxu0 0.0
        %1021 = vmatpush.msra.mxu0 0.0
        %1022 = vmatpush.msra.mxu0 0.0
        %1023 = vmatpush.msra.mxu0 0.0
        %1024 = vmatpush.msra.mxu0 0.0
        %1025 = vmatpush.msra.mxu0 0.0
        %1026 = vmatpush.msra.mxu0 0.0
        %1027 = vmatpush.msra.mxu0 0.0
        %1028 = vmatpush.msra.mxu0 %v1005
        %1029 = vmatpush.msra.mxu0 %v1003
        %1030 = vmatmul.f32.gmra.mxu0 %v1009
        %v1031 = vpop.f32.mrf.mxu0
        %v1032 = vadd.f32 0.0, %v1031
        %1033 = vmatmul.f32.gmra.mxu0 %v1012
        %v1034 = vpop.f32.mrf.mxu0
        %v1035 = vadd.f32 0.0, %v1034
        %1036 = vdwg.mxu0
        %v1038 = vsel %vm816, %v1032, 0
        %v1041 = vsel %vm816, %v1035, 0
        %1043 = vmatpush.msra.mxu0 0.0
        %1044 = vmatpush.msra.mxu0 0.0
        %1045 = vmatpush.msra.mxu0 0.0
        %1046 = vmatpush.msra.mxu0 0.0
        %1047 = vmatpush.msra.mxu0 0.0
        %1048 = vmatpush.msra.mxu0 0.0
        %1049 = vmatpush.msra.mxu0 0.0
        %1050 = vmatpush.msra.mxu0 0.0
        %1051 = vmatpush.msra.mxu0 0.0
        %1052 = vmatpush.msra.mxu0 0.0
        %1053 = vmatpush.msra.mxu0 0.0
        %1054 = vmatpush.msra.mxu0 0.0
        %1055 = vmatpush.msra.mxu0 0.0
        %1056 = vmatpush.msra.mxu0 0.0
        %1057 = vmatpush.msra.mxu0 %v688
        %1058 = vmatpush.msra.mxu0 %v687
        %1059 = vmatmul.f32.gmra.mxu0 %v1038
        %v1060 = vpop.f32.mrf.mxu0
        %v1061 = vadd.f32 0.0, %v1060
        %1062 = vmatmul.f32.gmra.mxu0 %v1041
        %v1063 = vpop.f32.mrf.mxu0
        %v1064 = vadd.f32 0.0, %v1063
        %1065 = vdwg.mxu0
        %v1066 = vadd.f32 %v939, %v1061
        %v1067 = vadd.f32 %v940, %v1064
        %v1068 = vadd.f32 %v667, %v1066
        %v1069 = vadd.f32 %v668, %v1067
        %v1070 = vsel %vm714, %v1068, 0.0
        %1071 = vadd.xlane.f32.xlu0 %v1070
        %v1072 = vpop.xlane.xlu0 %1071
        %v1073 = vsel %vm714, %v1069, 0.0
        %1074 = vadd.xlane.f32.xlu0 %v1073
        %v1075 = vpop.xlane.xlu0 %1074
        %v1076 = vmul.f32 %v1072, %v727
        %v1077 = vmul.f32 %v1075, %v727
        %v1078 = vsub.f32 %v1068, %v1076
        %v1079 = vsub.f32 %v1069, %v1077
        %v1080 = vmul.f32 %v1078, %v1078
        %v1081 = vmul.f32 %v1079, %v1079
        %v1082 = vsel %vm714, %v1080, 0.0
        %1083 = vadd.xlane.f32.xlu0 %v1082
        %v1084 = vpop.xlane.xlu0 %1083
        %v1085 = vsel %vm714, %v1081, 0.0
        %1086 = vadd.xlane.f32.xlu0 %v1085
        %v1087 = vpop.xlane.xlu0 %1086
        %v1088 = vmul.f32 %v1084, %v727
        %v1089 = vmul.f32 %v1087, %v727
        %v1090 = vadd.f32 %v1088, 1e-05
        %v1091 = vadd.f32 %v1089, 1e-05
        %v1092 = vrsqrt.pop %v1090
        %v1093 = vmul.f32 %v1092, %v1090
        %v1094 = vmul.f32 %v1093, %v1092
        %v1095 = vmul.f32 0.5, %v1094
        %v1096 = vsub.f32 1.5, %v1095
        %v1097 = vmul.f32 %v1092, %v1096
        %vm1098 = vweird.f32 %v1090
        %vm1099 = vweird.f32 %v1092
        %vm1100 = vmor %vm1098, %vm1099
        %v1101 = vsel %vm1100, %v1092, %v1097
        %v1102 = vrsqrt.pop %v1091
        %v1103 = vmul.f32 %v1102, %v1091
        %v1104 = vmul.f32 %v1103, %v1102
        %v1105 = vmul.f32 0.5, %v1104
        %v1106 = vsub.f32 1.5, %v1105
        %v1107 = vmul.f32 %v1102, %v1106
        %vm1108 = vweird.f32 %v1091
        %vm1109 = vweird.f32 %v1102
        %vm1110 = vmor %vm1108, %vm1109
        %v1111 = vsel %vm1110, %v1102, %v1107
        %v1112 = vmul.f32 %v1078, %v1101
        %v1113 = vmul.f32 %v1079, %v1111
        %v1115 = vperm.slane %v690, 0
        %v1117 = vmul.f32 %v1112, %v1115
        %v1118 = vmul.f32 %v1113, %v1115
        %v1120 = vperm.slane %v691, 0
        %v1122 = vadd.f32 %v1117, %v1120
        %v1123 = vadd.f32 %v1118, %v1120
        %v1125 = vperm.slane %v696, 0
        %v1128 = vsel %vm714, %v1122, 0
        %v1131 = vsel %vm714, %v1123, 0
        %1133 = vmatpush.msra.mxu0 0.0
        %1134 = vmatpush.msra.mxu0 0.0
        %1135 = vmatpush.msra.mxu0 0.0
        %1136 = vmatpush.msra.mxu0 0.0
        %1137 = vmatpush.msra.mxu0 0.0
        %1138 = vmatpush.msra.mxu0 0.0
        %1139 = vmatpush.msra.mxu0 0.0
        %1140 = vmatpush.msra.mxu0 0.0
        %1141 = vmatpush.msra.mxu0 0.0
        %1142 = vmatpush.msra.mxu0 0.0
        %1143 = vmatpush.msra.mxu0 0.0
        %1144 = vmatpush.msra.mxu0 0.0
        %1145 = vmatpush.msra.mxu0 %v695
        %1146 = vmatpush.msra.mxu0 %v694
        %1147 = vmatpush.msra.mxu0 %v693
        %1148 = vmatpush.msra.mxu0 %v692
        %1149 = vmatmul.f32.gmra.mxu0 %v1128
        %v1150 = vpop.f32.mrf.mxu0
        %v1151 = vadd.f32 %v1125, %v1150
        %1152 = vmatmul.f32.gmra.mxu0 %v1131
        %v1153 = vpop.f32.mrf.mxu0
        %v1154 = vadd.f32 %v1125, %v1153
        %1155 = vdwg.mxu0
        %v1156 = vmul.f32 %v1151, 0.5
        %v1157 = vmul.f32 %v1154, 0.5
        %v1158 = vmul.f32 %v1151, 0.044715
        %v1159 = vmul.f32 %v1154, 0.044715
        %v1160 = vmul.f32 %v1158, %v1151
        %v1161 = vmul.f32 %v1159, %v1154
        %v1162 = vmul.f32 %v1160, %v1151
        %v1163 = vmul.f32 %v1161, %v1154
        %v1164 = vadd.f32 %v1151, %v1162
        %v1165 = vadd.f32 %v1154, %v1163
        %v1166 = vmul.f32 %v1164, 0.7978846
        %v1167 = vmul.f32 %v1165, 0.7978846
        %v1168 = vtanh.pop %v1166
        %v1169 = vtanh.pop %v1167
        %v1170 = vadd.f32 %v1168, 1.0
        %v1171 = vadd.f32 %v1169, 1.0
        %v1172 = vmul.f32 %v1156, %v1170
        %v1173 = vmul.f32 %v1157, %v1171
        %v1175 = vperm.slane %v713, 0
        %1177 = vmatpush.msra.mxu0 %v712
        %1178 = vmatpush.msra.mxu0 %v711
        %1179 = vmatpush.msra.mxu0 %v710
        %1180 = vmatpush.msra.mxu0 %v709
        %1181 = vmatpush.msra.mxu0 %v708
        %1182 = vmatpush.msra.mxu0 %v707
        %1183 = vmatpush.msra.mxu0 %v706
        %1184 = vmatpush.msra.mxu0 %v705
        %1185 = vmatpush.msra.mxu0 %v704
        %1186 = vmatpush.msra.mxu0 %v703
        %1187 = vmatpush.msra.mxu0 %v702
        %1188 = vmatpush.msra.mxu0 %v701
        %1189 = vmatpush.msra.mxu0 %v700
        %1190 = vmatpush.msra.mxu0 %v699
        %1191 = vmatpush.msra.mxu0 %v698
        %1192 = vmatpush.msra.mxu0 %v697
        %1193 = vmatmul.f32.gmra.mxu0 %v1172
        %v1194 = vpop.f32.mrf.mxu0
        %v1195 = vadd.f32 %v1175, %v1194
        %1196 = vmatmul.f32.gmra.mxu0 %v1173
        %v1197 = vpop.f32.mrf.mxu0
        %v1198 = vadd.f32 %v1175, %v1197
        %1199 = vdwg.mxu0
        %v1200 = vadd.f32 %v1068, %v1195
        %v1201 = vadd.f32 %v1069, %v1198
        %s1202 = scalar_lea.vmem %s4, 1
        %v1203 = vld [vmem:[%s1202] sm:$0x1]
        %s1204 = scalar_lea.vmem %s5, 1
        %v1205 = vld [vmem:[%s1204] sm:$0x1]
        %s1206 = scalar_lea.vmem %s6, 32
        %v1207 = vld [vmem:[%s1206] sm:$0xff]
        %v1208 = vld [vmem:[%s1206 + $0x8] sm:$0xff]
        %v1209 = vld [vmem:[%s1206 + $0x10] sm:$0xff]
        %v1210 = vld [vmem:[%s1206 + $0x18] sm:$0xff]
        %s1211 = scalar_lea.vmem %s7, 1
        %v1212 = vld [vmem:[%s1211] sm:$0x1]
        %s1213 = scalar_lea.vmem %s8, 32
        %v1214 = vld [vmem:[%s1213] sm:$0xff]
        %v1215 = vld [vmem:[%s1213 + $0x8] sm:$0xff]
        %v1216 = vld [vmem:[%s1213 + $0x10] sm:$0xff]
        %v1217 = vld [vmem:[%s1213 + $0x18] sm:$0xff]
        %s1218 = scalar_lea.vmem %s9, 1
        %v1219 = vld [vmem:[%s1218] sm:$0x1]
        %s1220 = scalar_lea.vmem %s10, 1
        %v1221 = vld [vmem:[%s1220] sm:$0x1]
        %s1222 = scalar_lea.vmem %s11, 1
        %v1223 = vld [vmem:[%s1222] sm:$0x1]
        %s1224 = scalar_lea.vmem %s12, 32
        %v1225 = vld [vmem:[%s1224] sm:$0xff]
        %v1226 = vld [vmem:[%s1224 + $0x8] sm:$0xff]
        %v1227 = vld [vmem:[%s1224 + $0x10] sm:$0xff]
        %v1228 = vld [vmem:[%s1224 + $0x18] sm:$0xff]
        %s1229 = scalar_lea.vmem %s13, 1
        %v1230 = vld [vmem:[%s1229] sm:$0x1]
        %s1231 = scalar_lea.vmem %s14, 128
        %v1232 = vld [vmem:[%s1231] sm:$0xff]
        %v1233 = vld [vmem:[%s1231 + $0x8] sm:$0xff]
        %v1234 = vld [vmem:[%s1231 + $0x10] sm:$0xff]
        %v1235 = vld [vmem:[%s1231 + $0x18] sm:$0xff]
        %v1236 = vld [vmem:[%s1231 + $0x20] sm:$0xff]
        %v1237 = vld [vmem:[%s1231 + $0x28] sm:$0xff]
        %v1238 = vld [vmem:[%s1231 + $0x30] sm:$0xff]
        %v1239 = vld [vmem:[%s1231 + $0x38] sm:$0xff]
        %v1240 = vld [vmem:[%s1231 + $0x40] sm:$0xff]
        %v1241 = vld [vmem:[%s1231 + $0x48] sm:$0xff]
        %v1242 = vld [vmem:[%s1231 + $0x50] sm:$0xff]
        %v1243 = vld [vmem:[%s1231 + $0x58] sm:$0xff]
        %v1244 = vld [vmem:[%s1231 + $0x60] sm:$0xff]
        %v1245 = vld [vmem:[%s1231 + $0x68] sm:$0xff]
        %v1246 = vld [vmem:[%s1231 + $0x70] sm:$0xff]
        %v1247 = vld [vmem:[%s1231 + $0x78] sm:$0xff]
        %s1248 = scalar_lea.vmem %s15, 1
        %v1249 = vld [vmem:[%s1248] sm:$0x1]
        %v1250 = vsel %vm714, %v1200, 0.0
        %1251 = vadd.xlane.f32.xlu0 %v1250
        %v1252 = vpop.xlane.xlu0 %1251
        %v1253 = vsel %vm714, %v1201, 0.0
        %1254 = vadd.xlane.f32.xlu0 %v1253
        %v1255 = vpop.xlane.xlu0 %1254
        %v1256 = vmul.f32 %v1252, %v727
        %v1257 = vmul.f32 %v1255, %v727
        %v1258 = vsub.f32 %v1200, %v1256
        %v1259 = vsub.f32 %v1201, %v1257
        %v1260 = vmul.f32 %v1258, %v1258
        %v1261 = vmul.f32 %v1259, %v1259
        %v1262 = vsel %vm714, %v1260, 0.0
        %1263 = vadd.xlane.f32.xlu0 %v1262
        %v1264 = vpop.xlane.xlu0 %1263
        %v1265 = vsel %vm714, %v1261, 0.0
        %1266 = vadd.xlane.f32.xlu0 %v1265
        %v1267 = vpop.xlane.xlu0 %1266
        %v1268 = vmul.f32 %v1264, %v727
        %v1269 = vmul.f32 %v1267, %v727
        %v1270 = vadd.f32 %v1268, 1e-05
        %v1271 = vadd.f32 %v1269, 1e-05
        %v1272 = vrsqrt.pop %v1270
        %v1273 = vmul.f32 %v1272, %v1270
        %v1274 = vmul.f32 %v1273, %v1272
        %v1275 = vmul.f32 0.5, %v1274
        %v1276 = vsub.f32 1.5, %v1275
        %v1277 = vmul.f32 %v1272, %v1276
        %vm1278 = vweird.f32 %v1270
        %vm1279 = vweird.f32 %v1272
        %vm1280 = vmor %vm1278, %vm1279
        %v1281 = vsel %vm1280, %v1272, %v1277
        %v1282 = vrsqrt.pop %v1271
        %v1283 = vmul.f32 %v1282, %v1271
        %v1284 = vmul.f32 %v1283, %v1282
        %v1285 = vmul.f32 0.5, %v1284
        %v1286 = vsub.f32 1.5, %v1285
        %v1287 = vmul.f32 %v1282, %v1286
        %vm1288 = vweird.f32 %v1271
        %vm1289 = vweird.f32 %v1282
        %vm1290 = vmor %vm1288, %vm1289
        %v1291 = vsel %vm1290, %v1282, %v1287
        %v1292 = vmul.f32 %v1258, %v1281
        %v1293 = vmul.f32 %v1259, %v1291
        %v1295 = vperm.slane %v1203, 0
        %v1297 = vmul.f32 %v1292, %v1295
        %v1298 = vmul.f32 %v1293, %v1295
        %v1300 = vperm.slane %v1205, 0
        %v1302 = vadd.f32 %v1297, %v1300
        %v1303 = vadd.f32 %v1298, %v1300
        %v1305 = vperm.slane %v1212, 0
        %v1308 = vsel %vm714, %v1302, 0
        %v1311 = vsel %vm714, %v1303, 0
        %1313 = vmatpush.msra.mxu0 0.0
        %1314 = vmatpush.msra.mxu0 0.0
        %1315 = vmatpush.msra.mxu0 0.0
        %1316 = vmatpush.msra.mxu0 0.0
        %1317 = vmatpush.msra.mxu0 0.0
        %1318 = vmatpush.msra.mxu0 0.0
        %1319 = vmatpush.msra.mxu0 0.0
        %1320 = vmatpush.msra.mxu0 0.0
        %1321 = vmatpush.msra.mxu0 0.0
        %1322 = vmatpush.msra.mxu0 0.0
        %1323 = vmatpush.msra.mxu0 0.0
        %1324 = vmatpush.msra.mxu0 0.0
        %1325 = vmatpush.msra.mxu0 %v1210
        %1326 = vmatpush.msra.mxu0 %v1209
        %1327 = vmatpush.msra.mxu0 %v1208
        %1328 = vmatpush.msra.mxu0 %v1207
        %1329 = vmatmul.f32.gmra.mxu0 %v1308
        %v1330 = vpop.f32.mrf.mxu0
        %v1331 = vadd.f32 %v1305, %v1330
        %1332 = vmatmul.f32.gmra.mxu0 %v1311
        %v1333 = vpop.f32.mrf.mxu0
        %v1334 = vadd.f32 %v1305, %v1333
        %1335 = vdwg.mxu0
        %v1336 = vmul.f32 %v1331, 0.25
        %v1337 = vmul.f32 %v1334, 0.25
        %1340 = vrot.lane.b32.xlu0 %v1331, 96
        %v1341 = vpop.permute.xlu0 %1340
        %1342 = vrot.lane.b32.xlu0 %v1334, 96
        %v1343 = vpop.permute.xlu0 %1342
        %v1345 = vsel %vm816, %v1336, 0
        %v1348 = vsel %vm816, %v1337, 0
        %v1350 = vsel %vm816, %v1341, 0
        %v1352 = vsel %vm816, %v1343, 0
        %1354 = vmatpush.xpose.msra.mxu0 0.0
        %1355 = vmatpush.xpose.msra.mxu0 0.0
        %1356 = vmatpush.xpose.msra.mxu0 0.0
        %1357 = vmatpush.xpose.msra.mxu0 0.0
        %1358 = vmatpush.xpose.msra.mxu0 0.0
        %1359 = vmatpush.xpose.msra.mxu0 0.0
        %1360 = vmatpush.xpose.msra.mxu0 0.0
        %1361 = vmatpush.xpose.msra.mxu0 0.0
        %1362 = vmatpush.xpose.msra.mxu0 0.0
        %1363 = vmatpush.xpose.msra.mxu0 0.0
        %1364 = vmatpush.xpose.msra.mxu0 0.0
        %1365 = vmatpush.xpose.msra.mxu0 0.0
        %1366 = vmatpush.xpose.msra.mxu0 0.0
        %1367 = vmatpush.xpose.msra.mxu0 0.0
        %1368 = vmatpush.xpose.msra.mxu0 %v1352
        %1369 = vmatpush.xpose.msra.mxu0 %v1350
        %1370 = vmatmul.f32.gmra.mxu0 %v1345
        %v1371 = vpop.f32.mrf.mxu0
        %v1372 = vadd.f32 %v676, %v1371
        %1373 = vmatmul.f32.gmra.mxu0 %v1348
        %v1374 = vpop.f32.mrf.mxu0
        %v1375 = vadd.f32 %v677, %v1374
        %1376 = vdwg.mxu0
        %v1377 = vsel %vm816, %v1372, -inf
        %1378 = vmax.xlane.f32.xlu0 %v1377
        %v1379 = vpop.xlane.xlu0 %1378
        %v1380 = vsel %vm816, %v1375, -inf
        %1381 = vmax.xlane.f32.xlu0 %v1380
        %v1382 = vpop.xlane.xlu0 %1381
        %v1383 = vsub.f32 %v1372, %v1379
        %v1384 = vsub.f32 %v1375, %v1382
        %v1385 = vmul.f32 %v1383, 1.442695
        %v1386 = vpow.pop %v1385
        %v1387 = vmul.f32 %v1384, 1.442695
        %v1388 = vpow.pop %v1387
        %v1389 = vsel %vm816, %v1386, 0.0
        %1390 = vadd.xlane.f32.xlu0 %v1389
        %v1391 = vpop.xlane.xlu0 %1390
        %v1392 = vsel %vm816, %v1388, 0.0
        %1393 = vadd.xlane.f32.xlu0 %v1392
        %v1394 = vpop.xlane.xlu0 %1393
        %v1395 = vrcp.pop %v1391
        %v1396 = vrcp.pop %v1394
        %v1397 = vmul.f32 %v1386, %v1395
        %v1398 = vmul.f32 %v1388, %v1396
        %1399 = vrot.lane.b32.xlu0 %v1331, 64
        %v1400 = vpop.permute.xlu0 %1399
        %1401 = vrot.lane.b32.xlu0 %v1334, 64
        %v1402 = vpop.permute.xlu0 %1401
        %v1406 = vsel %vm816, %v1397, 0
        %v1409 = vsel %vm816, %v1398, 0
        %1411 = vmatpush.msra.mxu0 0.0
        %1412 = vmatpush.msra.mxu0 0.0
        %1413 = vmatpush.msra.mxu0 0.0
        %1414 = vmatpush.msra.mxu0 0.0
        %1415 = vmatpush.msra.mxu0 0.0
        %1416 = vmatpush.msra.mxu0 0.0
        %1417 = vmatpush.msra.mxu0 0.0
        %1418 = vmatpush.msra.mxu0 0.0
        %1419 = vmatpush.msra.mxu0 0.0
        %1420 = vmatpush.msra.mxu0 0.0
        %1421 = vmatpush.msra.mxu0 0.0
        %1422 = vmatpush.msra.mxu0 0.0
        %1423 = vmatpush.msra.mxu0 0.0
        %1424 = vmatpush.msra.mxu0 0.0
        %1425 = vmatpush.msra.mxu0 %v1402
        %1426 = vmatpush.msra.mxu0 %v1400
        %1427 = vmatmul.f32.gmra.mxu0 %v1406
        %v1428 = vpop.f32.mrf.mxu0
        %v1429 = vadd.f32 0.0, %v1428
        %1430 = vmatmul.f32.gmra.mxu0 %v1409
        %v1431 = vpop.f32.mrf.mxu0
        %v1432 = vadd.f32 0.0, %v1431
        %1433 = vdwg.mxu0
        %v1435 = vsel %vm816, %v1429, 0
        %v1438 = vsel %vm816, %v1432, 0
        %1440 = vmatpush.msra.mxu0 0.0
        %1441 = vmatpush.msra.mxu0 0.0
        %1442 = vmatpush.msra.mxu0 0.0
        %1443 = vmatpush.msra.mxu0 0.0
        %1444 = vmatpush.msra.mxu0 0.0
        %1445 = vmatpush.msra.mxu0 0.0
        %1446 = vmatpush.msra.mxu0 0.0
        %1447 = vmatpush.msra.mxu0 0.0
        %1448 = vmatpush.msra.mxu0 0.0
        %1449 = vmatpush.msra.mxu0 0.0
        %1450 = vmatpush.msra.mxu0 0.0
        %1451 = vmatpush.msra.mxu0 0.0
        %1452 = vmatpush.msra.mxu0 0.0
        %1453 = vmatpush.msra.mxu0 0.0
        %1454 = vmatpush.msra.mxu0 %v1215
        %1455 = vmatpush.msra.mxu0 %v1214
        %1456 = vmatmul.f32.gmra.mxu0 %v1435
        %v1457 = vpop.f32.mrf.mxu0
        %v1458 = vadd.f32 0.0, %v1457
        %1459 = vmatmul.f32.gmra.mxu0 %v1438
        %v1460 = vpop.f32.mrf.mxu0
        %v1461 = vadd.f32 0.0, %v1460
        %1462 = vdwg.mxu0
        %v1464 = vperm.slane %v1219, 0
        %v1466 = vadd.f32 %v1464, %v1458
        %v1467 = vadd.f32 %v1464, %v1461
        %1468 = vrot.lane.b32.xlu0 %v1336, 112
        %v1469 = vpop.permute.xlu0 %1468
        %1470 = vrot.lane.b32.xlu0 %v1337, 112
        %v1471 = vpop.permute.xlu0 %1470
        %1472 = vrot.lane.b32.xlu0 %v1331, 80
        %v1473 = vpop.permute.xlu0 %1472
        %1474 = vrot.lane.b32.xlu0 %v1334, 80
        %v1475 = vpop.permute.xlu0 %1474
        %v1476 = vsel %vm816, %v1469, 0
        %v1478 = vsel %vm816, %v1471, 0
        %v1480 = vsel %vm816, %v1473, 0
        %v1482 = vsel %vm816, %v1475, 0
        %1484 = vmatpush.xpose.msra.mxu0 0.0
        %1485 = vmatpush.xpose.msra.mxu0 0.0
        %1486 = vmatpush.xpose.msra.mxu0 0.0
        %1487 = vmatpush.xpose.msra.mxu0 0.0
        %1488 = vmatpush.xpose.msra.mxu0 0.0
        %1489 = vmatpush.xpose.msra.mxu0 0.0
        %1490 = vmatpush.xpose.msra.mxu0 0.0
        %1491 = vmatpush.xpose.msra.mxu0 0.0
        %1492 = vmatpush.xpose.msra.mxu0 0.0
        %1493 = vmatpush.xpose.msra.mxu0 0.0
        %1494 = vmatpush.xpose.msra.mxu0 0.0
        %1495 = vmatpush.xpose.msra.mxu0 0.0
        %1496 = vmatpush.xpose.msra.mxu0 0.0
        %1497 = vmatpush.xpose.msra.mxu0 0.0
        %1498 = vmatpush.xpose.msra.mxu0 %v1482
        %1499 = vmatpush.xpose.msra.mxu0 %v1480
        %1500 = vmatmul.f32.gmra.mxu0 %v1476
        %v1501 = vpop.f32.mrf.mxu0
        %v1502 = vadd.f32 %v676, %v1501
        %1503 = vmatmul.f32.gmra.mxu0 %v1478
        %v1504 = vpop.f32.mrf.mxu0
        %v1505 = vadd.f32 %v677, %v1504
        %1506 = vdwg.mxu0
        %v1507 = vsel %vm816, %v1502, -inf
        %1508 = vmax.xlane.f32.xlu0 %v1507
        %v1509 = vpop.xlane.xlu0 %1508
        %v1510 = vsel %vm816, %v1505, -inf
        %1511 = vmax.xlane.f32.xlu0 %v1510
        %v1512 = vpop.xlane.xlu0 %1511
        %v1513 = vsub.f32 %v1502, %v1509
        %v1514 = vsub.f32 %v1505, %v1512
        %v1515 = vmul.f32 %v1513, 1.442695
        %v1516 = vpow.pop %v1515
        %v1517 = vmul.f32 %v1514, 1.442695
        %v1518 = vpow.pop %v1517
        %v1519 = vsel %vm816, %v1516, 0.0
        %1520 = vadd.xlane.f32.xlu0 %v1519
        %v1521 = vpop.xlane.xlu0 %1520
        %v1522 = vsel %vm816, %v1518, 0.0
        %1523 = vadd.xlane.f32.xlu0 %v1522
        %v1524 = vpop.xlane.xlu0 %1523
        %v1525 = vrcp.pop %v1521
        %v1526 = vrcp.pop %v1524
        %v1527 = vmul.f32 %v1516, %v1525
        %v1528 = vmul.f32 %v1518, %v1526
        %1529 = vrot.lane.b32.xlu0 %v1331, 48
        %v1530 = vpop.permute.xlu0 %1529
        %1531 = vrot.lane.b32.xlu0 %v1334, 48
        %v1532 = vpop.permute.xlu0 %1531
        %v1536 = vsel %vm816, %v1527, 0
        %v1539 = vsel %vm816, %v1528, 0
        %1541 = vmatpush.msra.mxu0 0.0
        %1542 = vmatpush.msra.mxu0 0.0
        %1543 = vmatpush.msra.mxu0 0.0
        %1544 = vmatpush.msra.mxu0 0.0
        %1545 = vmatpush.msra.mxu0 0.0
        %1546 = vmatpush.msra.mxu0 0.0
        %1547 = vmatpush.msra.mxu0 0.0
        %1548 = vmatpush.msra.mxu0 0.0
        %1549 = vmatpush.msra.mxu0 0.0
        %1550 = vmatpush.msra.mxu0 0.0
        %1551 = vmatpush.msra.mxu0 0.0
        %1552 = vmatpush.msra.mxu0 0.0
        %1553 = vmatpush.msra.mxu0 0.0
        %1554 = vmatpush.msra.mxu0 0.0
        %1555 = vmatpush.msra.mxu0 %v1532
        %1556 = vmatpush.msra.mxu0 %v1530
        %1557 = vmatmul.f32.gmra.mxu0 %v1536
        %v1558 = vpop.f32.mrf.mxu0
        %v1559 = vadd.f32 0.0, %v1558
        %1560 = vmatmul.f32.gmra.mxu0 %v1539
        %v1561 = vpop.f32.mrf.mxu0
        %v1562 = vadd.f32 0.0, %v1561
        %1563 = vdwg.mxu0
        %v1565 = vsel %vm816, %v1559, 0
        %v1568 = vsel %vm816, %v1562, 0
        %1570 = vmatpush.msra.mxu0 0.0
        %1571 = vmatpush.msra.mxu0 0.0
        %1572 = vmatpush.msra.mxu0 0.0
        %1573 = vmatpush.msra.mxu0 0.0
        %1574 = vmatpush.msra.mxu0 0.0
        %1575 = vmatpush.msra.mxu0 0.0
        %1576 = vmatpush.msra.mxu0 0.0
        %1577 = vmatpush.msra.mxu0 0.0
        %1578 = vmatpush.msra.mxu0 0.0
        %1579 = vmatpush.msra.mxu0 0.0
        %1580 = vmatpush.msra.mxu0 0.0
        %1581 = vmatpush.msra.mxu0 0.0
        %1582 = vmatpush.msra.mxu0 0.0
        %1583 = vmatpush.msra.mxu0 0.0
        %1584 = vmatpush.msra.mxu0 %v1217
        %1585 = vmatpush.msra.mxu0 %v1216
        %1586 = vmatmul.f32.gmra.mxu0 %v1565
        %v1587 = vpop.f32.mrf.mxu0
        %v1588 = vadd.f32 0.0, %v1587
        %1589 = vmatmul.f32.gmra.mxu0 %v1568
        %v1590 = vpop.f32.mrf.mxu0
        %v1591 = vadd.f32 0.0, %v1590
        %1592 = vdwg.mxu0
        %v1593 = vadd.f32 %v1466, %v1588
        %v1594 = vadd.f32 %v1467, %v1591
        %v1595 = vadd.f32 %v1200, %v1593
        %v1596 = vadd.f32 %v1201, %v1594
        %v1597 = vsel %vm714, %v1595, 0.0
        %1598 = vadd.xlane.f32.xlu0 %v1597
        %v1599 = vpop.xlane.xlu0 %1598
        %v1600 = vsel %vm714, %v1596, 0.0
        %1601 = vadd.xlane.f32.xlu0 %v1600
        %v1602 = vpop.xlane.xlu0 %1601
        %v1603 = vmul.f32 %v1599, %v727
        %v1604 = vmul.f32 %v1602, %v727
        %v1605 = vsub.f32 %v1595, %v1603
        %v1606 = vsub.f32 %v1596, %v1604
        %v1607 = vmul.f32 %v1605, %v1605
        %v1608 = vmul.f32 %v1606, %v1606
        %v1609 = vsel %vm714, %v1607, 0.0
        %1610 = vadd.xlane.f32.xlu0 %v1609
        %v1611 = vpop.xlane.xlu0 %1610
        %v1612 = vsel %vm714, %v1608, 0.0
        %1613 = vadd.xlane.f32.xlu0 %v1612
        %v1614 = vpop.xlane.xlu0 %1613
        %v1615 = vmul.f32 %v1611, %v727
        %v1616 = vmul.f32 %v1614, %v727
        %v1617 = vadd.f32 %v1615, 1e-05
        %v1618 = vadd.f32 %v1616, 1e-05
        %v1619 = vrsqrt.pop %v1617
        %v1620 = vmul.f32 %v1619, %v1617
        %v1621 = vmul.f32 %v1620, %v1619
        %v1622 = vmul.f32 0.5, %v1621
        %v1623 = vsub.f32 1.5, %v1622
        %v1624 = vmul.f32 %v1619, %v1623
        %vm1625 = vweird.f32 %v1617
        %vm1626 = vweird.f32 %v1619
        %vm1627 = vmor %vm1625, %vm1626
        %v1628 = vsel %vm1627, %v1619, %v1624
        %v1629 = vrsqrt.pop %v1618
        %v1630 = vmul.f32 %v1629, %v1618
        %v1631 = vmul.f32 %v1630, %v1629
        %v1632 = vmul.f32 0.5, %v1631
        %v1633 = vsub.f32 1.5, %v1632
        %v1634 = vmul.f32 %v1629, %v1633
        %vm1635 = vweird.f32 %v1618
        %vm1636 = vweird.f32 %v1629
        %vm1637 = vmor %vm1635, %vm1636
        %v1638 = vsel %vm1637, %v1629, %v1634
        %v1639 = vmul.f32 %v1605, %v1628
        %v1640 = vmul.f32 %v1606, %v1638
        %v1642 = vperm.slane %v1221, 0
        %v1644 = vmul.f32 %v1639, %v1642
        %v1645 = vmul.f32 %v1640, %v1642
        %v1647 = vperm.slane %v1223, 0
        %v1649 = vadd.f32 %v1644, %v1647
        %v1650 = vadd.f32 %v1645, %v1647
        %v1652 = vperm.slane %v1230, 0
        %v1655 = vsel %vm714, %v1649, 0
        %v1658 = vsel %vm714, %v1650, 0
        %1660 = vmatpush.msra.mxu0 0.0
        %1661 = vmatpush.msra.mxu0 0.0
        %1662 = vmatpush.msra.mxu0 0.0
        %1663 = vmatpush.msra.mxu0 0.0
        %1664 = vmatpush.msra.mxu0 0.0
        %1665 = vmatpush.msra.mxu0 0.0
        %1666 = vmatpush.msra.mxu0 0.0
        %1667 = vmatpush.msra.mxu0 0.0
        %1668 = vmatpush.msra.mxu0 0.0
        %1669 = vmatpush.msra.mxu0 0.0
        %1670 = vmatpush.msra.mxu0 0.0
        %1671 = vmatpush.msra.mxu0 0.0
        %1672 = vmatpush.msra.mxu0 %v1228
        %1673 = vmatpush.msra.mxu0 %v1227
        %1674 = vmatpush.msra.mxu0 %v1226
        %1675 = vmatpush.msra.mxu0 %v1225
        %1676 = vmatmul.f32.gmra.mxu0 %v1655
        %v1677 = vpop.f32.mrf.mxu0
        %v1678 = vadd.f32 %v1652, %v1677
        %1679 = vmatmul.f32.gmra.mxu0 %v1658
        %v1680 = vpop.f32.mrf.mxu0
        %v1681 = vadd.f32 %v1652, %v1680
        %1682 = vdwg.mxu0
        %v1683 = vmul.f32 %v1678, 0.5
        %v1684 = vmul.f32 %v1681, 0.5
        %v1685 = vmul.f32 %v1678, 0.044715
        %v1686 = vmul.f32 %v1681, 0.044715
        %v1687 = vmul.f32 %v1685, %v1678
        %v1688 = vmul.f32 %v1686, %v1681
        %v1689 = vmul.f32 %v1687, %v1678
        %v1690 = vmul.f32 %v1688, %v1681
        %v1691 = vadd.f32 %v1678, %v1689
        %v1692 = vadd.f32 %v1681, %v1690
        %v1693 = vmul.f32 %v1691, 0.7978846
        %v1694 = vmul.f32 %v1692, 0.7978846
        %v1695 = vtanh.pop %v1693
        %v1696 = vtanh.pop %v1694
        %v1697 = vadd.f32 %v1695, 1.0
        %v1698 = vadd.f32 %v1696, 1.0
        %v1699 = vmul.f32 %v1683, %v1697
        %v1700 = vmul.f32 %v1684, %v1698
        %v1702 = vperm.slane %v1249, 0
        %1704 = vmatpush.msra.mxu0 %v1247
        %1705 = vmatpush.msra.mxu0 %v1246
        %1706 = vmatpush.msra.mxu0 %v1245
        %1707 = vmatpush.msra.mxu0 %v1244
        %1708 = vmatpush.msra.mxu0 %v1243
        %1709 = vmatpush.msra.mxu0 %v1242
        %1710 = vmatpush.msra.mxu0 %v1241
        %1711 = vmatpush.msra.mxu0 %v1240
        %1712 = vmatpush.msra.mxu0 %v1239
        %1713 = vmatpush.msra.mxu0 %v1238
        %1714 = vmatpush.msra.mxu0 %v1237
        %1715 = vmatpush.msra.mxu0 %v1236
        %1716 = vmatpush.msra.mxu0 %v1235
        %1717 = vmatpush.msra.mxu0 %v1234
        %1718 = vmatpush.msra.mxu0 %v1233
        %1719 = vmatpush.msra.mxu0 %v1232
        %1720 = vmatmul.f32.gmra.mxu0 %v1699
        %v1721 = vpop.f32.mrf.mxu0
        %v1722 = vadd.f32 %v1702, %v1721
        %1723 = vmatmul.f32.gmra.mxu0 %v1700
        %v1724 = vpop.f32.mrf.mxu0
        %v1725 = vadd.f32 %v1702, %v1724
        %1726 = vdwg.mxu0
        %v1727 = vadd.f32 %v1595, %v1722
        %v1728 = vadd.f32 %v1596, %v1725
        %1729 = vst.msk [vmem:[#allocation2] sm:$0xff] %vm714, %v1727
        %1730 = vst.msk [vmem:[#allocation2 + $0x8] sm:$0xff] %vm714, %v1728
        %v1731 = vld [vmem:[#allocation2] ss:$2 sm:$0xff]
        %v1732 = vld [vmem:[%s16] sm:$0x1]
        %v1733 = vld [vmem:[%s17] sm:$0x1]
        %v1734 = vsel %vm714, %v1731, 0.0
        %1735 = vadd.xlane.f32.xlu0 %v1734
        %v1736 = vpop.xlane.xlu0 %1735
        %v1737 = vmul.f32 %v1736, %v727
        %v1738 = vsub.f32 %v1731, %v1737
        %v1739 = vmul.f32 %v1738, %v1738
        %v1740 = vsel %vm714, %v1739, 0.0
        %1741 = vadd.xlane.f32.xlu0 %v1740
        %v1742 = vpop.xlane.xlu0 %1741
        %v1743 = vmul.f32 %v1742, %v727
        %v1744 = vadd.f32 %v1743, 1e-05
        %v1745 = vrsqrt.pop %v1744
        %v1746 = vmul.f32 %v1745, %v1744
        %v1747 = vmul.f32 %v1746, %v1745
        %v1748 = vmul.f32 0.5, %v1747
        %v1749 = vsub.f32 1.5, %v1748
        %v1750 = vmul.f32 %v1745, %v1749
        %vm1751 = vweird.f32 %v1744
        %vm1752 = vweird.f32 %v1745
        %vm1753 = vmor %vm1751, %vm1752
        %v1754 = vsel %vm1753, %v1745, %v1750
        %v1755 = vmul.f32 %v1738, %v1754
        %v1757 = vperm.slane %v1732, 0
        %v1759 = vmul.f32 %v1755, %v1757
        %v1761 = vperm.slane %v1733, 0
        %v1763 = vadd.f32 %v1759, %v1761
        %v1764 = vld [vmem:[%s18] sm:$0xff]
        %v1765 = vld [vmem:[%s18 + $0x8] sm:$0xff]
        %v1766 = vld [vmem:[%s18 + $0x10] sm:$0xff]
        %v1767 = vld [vmem:[%s18 + $0x18] sm:$0xff]
        %v1768 = vld [vmem:[%s19] sm:$0x1]
        %v1770 = vperm.slane %v1768, 0
        %v1773 = vsel %vm714, %v1763, 0
        %1775 = vmatpush.msra.mxu0 0.0
        %1776 = vmatpush.msra.mxu0 0.0
        %1777 = vmatpush.msra.mxu0 0.0
        %1778 = vmatpush.msra.mxu0 0.0
        %1779 = vmatpush.msra.mxu0 0.0
        %1780 = vmatpush.msra.mxu0 0.0
        %1781 = vmatpush.msra.mxu0 0.0
        %1782 = vmatpush.msra.mxu0 0.0
        %1783 = vmatpush.msra.mxu0 0.0
        %1784 = vmatpush.msra.mxu0 0.0
        %1785 = vmatpush.msra.mxu0 0.0
        %1786 = vmatpush.msra.mxu0 0.0
        %1787 = vmatpush.msra.mxu0 %v1767
        %1788 = vmatpush.msra.mxu0 %v1766
        %1789 = vmatpush.msra.mxu0 %v1765
        %1790 = vmatpush.msra.mxu0 %v1764
        %1791 = vmatmul.f32.gmra.mxu0 %v1773
        %v1792 = vpop.f32.mrf.mxu0
        %v1793 = vadd.f32 %v1770, %v1792
        %1794 = vdwg.mxu0
        %v1795 = vsub.f32 0.0, %v1793
        %v1796 = vmul.f32 %v1795, 1.442695
        %v1797 = vpow.pop %v1796
        %v1798 = vadd.f32 %v1797, 1.0
        %v1799 = vrcp.pop %v1798
        %v1800 = vmul.f32 %v1798, %v1799
        %v1801 = vsub.f32 1.0, %v1800
        %v1802 = vmul.f32 %v1799, %v1801
        %v1803 = vadd.f32 %v1799, %v1802
        %vm1804 = vweird.f32 %v1798
        %vm1805 = vweird.f32 %v1799
        %vm1806 = vmor %vm1804, %vm1805
        %v1807 = vsel %vm1806, %v1799, %v1803
        %v1808 = vand.u32 2147483647, %v1798
        %vm1809 = vcmp.eq.f32.partialorder %v1808, 8.507059e+37
        %v1810 = vand.u32 %v1798, 2147483648
        %v1811 = vor.u32 1.1754944e-38, %v1810
        %v1812 = vsel %vm1809, %v1811, %v1807
        %v1813 = vmul.f32 1.0, %v1812
        %v1814 = vsub.f32 %v1813, 0.5
        %v1815 = vmul.f32 %v1814, 1.4142135
        %1816 = vst.msk [vmem:[%s622] sm:$0xff] %vm635, %v1815
        %s1817 = sand.u32 %s467, 1
        %s1818 = scalar_lea.sflag [#allocation4], %s1817
        %s1819 = sand.u32 %s467, 1
        %s1820 = smul.addr %s1819, 8
        %s1821 = scalar_lea.vmem [#allocation3], %s1820
        // Predicated region
        $region101: #{tpu_custom_call.1} parent=99 // pred_check
          %p1822 = pneg %p477
        $region102: #{tpu_custom_call.1} parent=99 // pred_check_branch
          %1824 = sbr.rel (%p1822) target = $region104
        $region103: #{tpu_custom_call.1} parent=99 // pred_region
          %1826 = vsyncadd %s1818, 0
          %s1827 = smul.addr %s34, 8
          %s1828 = scalar_lea.hbm %s20, %s1827
          %s1830 = sshll.u32 %s1821, 4
          %s1831 = int_to_ptr.vmem [resolvable:$true] %s1830
          %s1832 = sshll.u32 %s1828, 4
          %s1833 = int_to_ptr.hbm [resolvable:$true] %s1832
          %1835 = dma.vmem_to_hbm [thread:$0]  %s1831, 128, %s1833, %s1818
        $region104: #{tpu_custom_call.1} parent=99 // pred_fallthru
          _
      $region100: #{tpu_custom_call.1} parent=5 // pred_fallthru
        _
      %p1836 = scmp.le.s32.totalorder 2, %s29
      // Predicated region
      $region105: #{tpu_custom_call.1} parent=5 // pred_check
        %p1837 = pneg %p1836
      $region106: #{tpu_custom_call.1} parent=5 // pred_check_branch
        %1839 = sbr.rel (%p1837) target = $region108
      $region107: #{tpu_custom_call.1} parent=5 // pred_region
        %s1840 = ssub.s32 %s29, 2
        // Predicated region
        $region109: #{tpu_custom_call.1} parent=107 // pred_check
          %p1841 = pneg %p483
        $region110: #{tpu_custom_call.1} parent=107 // pred_check_branch
          %1843 = sbr.rel (%p1841) target = $region112
        $region111: #{tpu_custom_call.1} parent=107 // pred_region
          %s1844 = sand.u32 %s468, 1
          %s1845 = scalar_lea.sflag [#allocation4], %s1844
          %s1846 = sand.u32 %s468, 1
          %s1847 = smul.addr %s1846, 8
          %s1848 = scalar_lea.vmem [#allocation3], %s1847
          %1850 = dma.done %s1845, 128
        $region112: #{tpu_custom_call.1} parent=107 // pred_fallthru
          _
      $region108: #{tpu_custom_call.1} parent=5 // pred_fallthru
        _
    $region6: #{tpu_custom_call.1} parent=1 // loop_footer
      %s33 = sadd.s32 1, %s29
    $region7: #{tpu_custom_call.1} parent=1 // loop_footer_branch
      %28 = sbr.rel target = $region3
    $region8: #{tpu_custom_call.1} parent=1 // loop_exit
      _
    %1851 = vsyncpa [#allocation4], 1
    %s1852 = scalar_lea.sflag [#allocation4], 1
    %1853 = vsyncpa %s1852, 1

</llo_original>
